<compile_context>
chip_gen: v5e
topology: v5e:2x2
jax: 0.10.0
libtpu: 0.0.40
codegen_flags: <defaults>
</compile_context>

<pallas_src>
import jax
import jax.numpy as jnp
from jax.experimental import pallas as pl
from jax.experimental.pallas import tpu as pltpu


def relu_conv1x1_kernel(w_ref, x_ref, o_ref):
    """o = W_block @ relu(X); W_block: (tn, C_in), X: (C_in, cols)."""
    x = jnp.maximum(x_ref[...], 0.0)  # ReLU fused ahead of the MXU contraction
    o_ref[...] = jnp.dot(
        w_ref[...], x, preferred_element_type=jnp.float32
    ).astype(o_ref.dtype)


def _pick_tn(c_out):
    """Output-channel tile: 2+ grid steps per TC on v6e/v7x, fewer steps on v5e."""
    kind = jax.devices()[0].device_kind.lower()
    if "v5" in kind and c_out % 256 == 0:
        return 256  # single TC, DMA-bound: avoid extra per-step overhead
    if c_out % 128 == 0:
        return 128  # lets each v7x TC pipeline >=2 steps; smaller exposed prologue
    return c_out


@jax.jit
def relu_conv1x1(x_nchw, w_oihw):
    """ReLU followed by a bias-free 1x1 Conv2d (NCHW in / NCHW out)."""
    n, c_in, h, w = x_nchw.shape
    c_out = w_oihw.shape[0]

    # NCHW -> (C_in, cols). For n == 1 this is a pure (free) reshape.
    if n == 1:
        x_mat = x_nchw.reshape(c_in, h * w)
    else:
        # TODO(synk): avoid this full HBM transpose for batch>1 (add a batch grid
        # axis instead); irrelevant for the stated (1, 2048, 7, 7) workload.
        x_mat = jnp.transpose(x_nchw, (1, 0, 2, 3)).reshape(c_in, n * h * w)
    cols = x_mat.shape[1]  # no lane padding: block last dim = full array dim

    # (C_out, C_in, 1, 1) -> (C_out, C_in): free reshape, no transpose.
    w_mat = w_oihw.reshape(c_out, c_in)

    tn = _pick_tn(c_out)
    grid = (c_out // tn,)

    itemsize = jnp.dtype(x_nchw.dtype).itemsize
    cost = pl.CostEstimate(
        flops=2 * c_out * c_in * cols,
        transcendentals=0,
        bytes_accessed=(
            w_mat.size * jnp.dtype(w_mat.dtype).itemsize
            + (x_mat.size + c_out * cols) * itemsize
        ),
    )

    out = pl.pallas_call(
        relu_conv1x1_kernel,
        out_shape=jax.ShapeDtypeStruct((c_out, cols), x_nchw.dtype),
        grid_spec=pltpu.PrefetchScalarGridSpec(
            num_scalar_prefetch=0,
            grid=grid,
            in_specs=[
                pl.BlockSpec((tn, c_in), lambda j: (j, 0)),     # weight slice
                pl.BlockSpec((c_in, cols), lambda j: (0, 0)),   # full input (invariant)
            ],
            out_specs=pl.BlockSpec((tn, cols), lambda j: (j, 0)),
        ),
        compiler_params=pltpu.CompilerParams(
            dimension_semantics=("parallel",),
        ),
        cost_estimate=cost,
    )(w_mat, x_mat)

    # (C_out, cols) -> NCHW
    if n == 1:
        return out.reshape(1, c_out, h, w)
    return jnp.transpose(out.reshape(c_out, n, h, w), (1, 0, 2, 3))


if __name__ == "__main__":
    key = jax.random.PRNGKey(0)
    kx, kw = jax.random.split(key)

    # Input implied by the module: (1, 2048, 7, 7), NCHW
    x = jax.random.normal(kx, (1, 2048, 7, 7), dtype=jnp.float32)

    # Conv2d(2048, 512, kernel_size=1, bias=False) weight: (512, 2048, 1, 1)
    fan_in = 2048  # C_in * kh * kw
    bound = 1.0 / (fan_in ** 0.5)
    w = jax.random.uniform(
        kw, (512, 2048, 1, 1), dtype=jnp.float32, minval=-bound, maxval=bound
    )

    y = relu_conv1x1(x, w)
    jax.block_until_ready(y)

    # sanity-check vs pure-JAX reference
    x_r = jnp.maximum(x, 0.0)
    ref = jnp.einsum("nchw,oc->nohw", x_r, w.reshape(512, 2048))
    assert y.shape == (1, 512, 7, 7), y.shape
    assert jnp.allclose(y, ref, atol=1e-4, rtol=1e-4)

    print("KERNEL_OK")
</pallas_src>

<mosaic_0001>
module attributes {stable_mosaic.version = 11 : i64} {
  func.func @relu_conv1x1_kernel(%arg0: i32, %arg1: memref<128x2048xf32, #tpu.memory_space<vmem>>, %arg2: memref<2048x49xf32, #tpu.memory_space<vmem>>, %arg3: memref<128x49xf32, #tpu.memory_space<vmem>>) attributes {dimension_semantics = [#tpu.dimension_semantics<parallel>], iteration_bounds = array<i64: 4>, scalar_prefetch = 0 : i64, scratch_operands = 0 : i64, tpu.core_type = #tpu.core_type<tc>, window_params = [{transform_indices = @transform_0, window_bounds = array<i64: 128, 2048>}, {pipeline_mode = #tpu.pipeline_mode<synchronous>, transform_indices = @transform_1, window_bounds = array<i64: 2048, 49>}, {transform_indices = @transform_2, window_bounds = array<i64: 128, 49>}]} {
    %c0 = arith.constant 0 : index
    %c0_0 = arith.constant 0 : index
    %0 = vector.load %arg2[%c0, %c0_0] : memref<2048x49xf32, #tpu.memory_space<vmem>>, vector<2048x49xf32>
    %cst = arith.constant 0.000000e+00 : f32
    %1 = vector.broadcast %cst : f32 to vector<2048x49xf32>
    %2 = arith.maximumf %0, %1 : vector<2048x49xf32>
    %c0_1 = arith.constant 0 : index
    %c0_2 = arith.constant 0 : index
    %3 = vector.load %arg1[%c0_1, %c0_2] : memref<128x2048xf32, #tpu.memory_space<vmem>>, vector<128x2048xf32>
    %cst_3 = arith.constant dense<0.000000e+00> : vector<128x49xf32>
    %4 = tpu.matmul %3, %2, %cst_3 {dimension_numbers = #tpu.dot_dimension_numbers<[1], [0], [0], [1], [0, 0, 1, 1], [], []>} : vector<128x2048xf32>, vector<2048x49xf32>, vector<128x49xf32> -> vector<128x49xf32>
    %c0_4 = arith.constant 0 : index
    %c0_5 = arith.constant 0 : index
    %5 = vector.load %arg3[%c0_4, %c0_5] : memref<128x49xf32, #tpu.memory_space<vmem>>, vector<128x49xf32>
    tpu.vector_store %arg3[%c0_4, %c0_5], %4 {strides = array<i32>} : memref<128x49xf32, #tpu.memory_space<vmem>>, vector<128x49xf32>,
    return
  }
  func.func @transform_0(%arg0: i32) -> (i32, i32) {
    %c0_i32 = arith.constant 0 : i32
    %c0_i32_0 = arith.constant 0 : i32
    return %arg0, %c0_i32 : i32, i32
  }
  func.func @transform_1(%arg0: i32) -> (i32, i32) {
    %c0_i32 = arith.constant 0 : i32
    %c0_i32_0 = arith.constant 0 : i32
    %c0_i32_1 = arith.constant 0 : i32
    return %c0_i32, %c0_i32_0 : i32, i32
  }
  func.func @transform_2(%arg0: i32) -> (i32, i32) {
    %c0_i32 = arith.constant 0 : i32
    %c0_i32_0 = arith.constant 0 : i32
    return %arg0, %c0_i32 : i32, i32
  }
}

</mosaic_0001>

<llo_original>
// kernel: relu_conv1x1.1
$region0: #{relu_conv1x1.1}
  #allocation0 [shape = 'u32[]', space=smem, size = 0x4, offset = 0x4, fixed_abs, tag = 'smem constant byte address 0x4 - core index']
  #allocation1 [shape = 'u32[72,128]{1,0:T(1,128)}', space=vmem, size = 0x9000, scoped, tag = 'internal scratch']
  %s0 = inlined_call_operand.vmem [shape: f32[512,2048], index: 0, kind: input, shape index: {}]
  %s1 = inlined_call_operand.vmem [shape: f32[2048,49], index: 1, kind: input, shape index: {}]
  %s2 = inlined_call_operand.vmem [shape: f32[512,49], index: 2, kind: output, shape index: {}]
  %s3 = sld [smem:[#allocation0]]
  $region41: #{relu_conv1x1.1} parent=0
    _
  %s5 = ssub.s32 1, %s3
  %s6 = scalar_select 0, %s5, %s3
  loop: start=0, step=1, limit=6
  $region2: #{relu_conv1x1.1} parent=0 // loop_pre_header
    _
  $region3: #{relu_conv1x1.1} parent=0 // loop_header
    %s8 = sphi 0, %s12
    %p9 = scmp.ge.s32.totalorder %s8, 6
    %s18 = sphi 0, %s20
    %s21 = sphi 0, %s18
    %s22 = sphi 0, %s21
    %s38 = sphi 0, %s22
    %s42 = sphi 0, %s42
    %s44 = sphi 0, %s42
    %s45 = sphi 0, %s44
    %s59 = sphi 0, %s45
    %s65 = sphi 0, %s67
    %s68 = sphi 0, %s65
    %s69 = sphi 0, %s68
    %s85 = sphi 0, %s69
  $region4: #{relu_conv1x1.1} parent=0 // loop_header_branch
    %11 = sbr.rel (%p9) target = $region8
  $region5: #{relu_conv1x1.1} parent=0 // loop_body
    %s13 = ssub.s32 %s8, 1
    %s14 = ssub.s32 %s8, 2
    %s15 = sadd.s32 %s8, 1
    %s16 = ssub.s32 %s8, %s15
    %p17 = scmp.eq.s32.totalorder %s16, 0
    %s19 = sadd.s32 %s18, 1
    %s20 = scalar_select %p17, %s18, %s19
    %p23 = pneg %p17
    %p24 = scmp.eq.s32.totalorder %s8, 3
    %p25 = por %p23, %p24
    %p26 = scmp.ne.s32.totalorder %s18, %s21
    %p27 = scmp.eq.s32.totalorder %s8, 0
    %p28 = por %p26, %p27
    %p29 = scmp.ne.s32.totalorder %s18, %s21
    %p30 = scmp.eq.s32.totalorder %s13, 3
    %p31 = por %p29, %p30
    %p32 = scmp.ne.s32.totalorder %s21, %s22
    %p33 = scmp.eq.s32.totalorder %s13, 0
    %p34 = por %p32, %p33
    %p35 = scmp.ne.s32.totalorder %s21, %s22
    %p36 = scmp.eq.s32.totalorder %s14, 3
    %p37 = por %p35, %p36
    %p39 = scmp.ne.s32.totalorder %s22, %s38
    %p40 = scmp.eq.s32.totalorder %s14, 0
    %p41 = por %p39, %p40
    %s43 = sadd.s32 %s42, 1
    %p46 = scmp.eq.s32.totalorder %s8, 3
    %p47 = scmp.ne.s32.totalorder %s42, %s44
    %p48 = scmp.eq.s32.totalorder %s8, 0
    %p49 = por %p47, %p48
    %p50 = scmp.ne.s32.totalorder %s42, %s44
    %p51 = scmp.eq.s32.totalorder %s13, 3
    %p52 = por %p50, %p51
    %p53 = scmp.ne.s32.totalorder %s44, %s45
    %p54 = scmp.eq.s32.totalorder %s13, 0
    %p55 = por %p53, %p54
    %p56 = scmp.ne.s32.totalorder %s44, %s45
    %p57 = scmp.eq.s32.totalorder %s14, 3
    %p58 = por %p56, %p57
    %p60 = scmp.ne.s32.totalorder %s45, %s59
    %p61 = scmp.eq.s32.totalorder %s14, 0
    %p62 = por %p60, %p61
    %s63 = ssub.s32 %s8, %s15
    %p64 = scmp.eq.s32.totalorder %s63, 0
    %s66 = sadd.s32 %s65, 1
    %s67 = scalar_select %p64, %s65, %s66
    %p70 = pneg %p64
    %p71 = scmp.eq.s32.totalorder %s8, 3
    %p72 = por %p70, %p71
    %p73 = scmp.ne.s32.totalorder %s65, %s68
    %p74 = scmp.eq.s32.totalorder %s8, 0
    %p75 = por %p73, %p74
    %p76 = scmp.ne.s32.totalorder %s65, %s68
    %p77 = scmp.eq.s32.totalorder %s13, 3
    %p78 = por %p76, %p77
    %p79 = scmp.ne.s32.totalorder %s68, %s69
    %p80 = scmp.eq.s32.totalorder %s13, 0
    %p81 = por %p79, %p80
    %p82 = scmp.ne.s32.totalorder %s68, %s69
    %p83 = scmp.eq.s32.totalorder %s14, 3
    %p84 = por %p82, %p83
    %p86 = scmp.ne.s32.totalorder %s69, %s85
    %p87 = scmp.eq.s32.totalorder %s14, 0
    %p88 = por %p86, %p87
    %p89 = scmp.le.s32.totalorder 1, %s8
    %p90 = scmp.lt.s32.totalorder %s8, 5
    %p91 = pnand %p89, %p90
    %p92 = pneg %p91
    // Predicated region
    $region9: #{relu_conv1x1.1} parent=5 // pred_check
      _
    $region10: #{relu_conv1x1.1} parent=5 // pred_check_branch
      %94 = sbr.rel (%p91) target = $region12
    $region11: #{relu_conv1x1.1} parent=5 // pred_region
      %s95 = ssub.s32 %s8, 1
      // Predicated region
      $region13: #{relu_conv1x1.1} parent=11 // pred_check
        %p96 = pneg %p55
      $region14: #{relu_conv1x1.1} parent=11 // pred_check_branch
        %98 = sbr.rel (%p96) target = $region16
      $region15: #{relu_conv1x1.1} parent=11 // pred_region
        _
      $region16: #{relu_conv1x1.1} parent=11 // pred_fallthru
        _
    $region12: #{relu_conv1x1.1} parent=5 // pred_fallthru
      _
    %p99 = scmp.lt.s32.totalorder %s8, 4
    // Predicated region
    $region17: #{relu_conv1x1.1} parent=5 // pred_check
      %p100 = pneg %p99
    $region18: #{relu_conv1x1.1} parent=5 // pred_check_branch
      %102 = sbr.rel (%p100) target = $region20
    $region19: #{relu_conv1x1.1} parent=5 // pred_region
      // Predicated region
      $region21: #{relu_conv1x1.1} parent=19 // pred_check
        %p103 = pneg %p28
      $region22: #{relu_conv1x1.1} parent=19 // pred_check_branch
        %105 = sbr.rel (%p103) target = $region24
      $region23: #{relu_conv1x1.1} parent=19 // pred_region
        %s106 = smul.u32 16, %s8
        %p107 = scmp.lt.s32.totalorder %s106, 63
        %s108 = scalar_select %p107, %s106, 63
        %s109 = smul.addr %s108, 16
        %s110 = smul.addr %s109, 8
        %s111 = scalar_lea.vmem %s0, %s110
        %s112 = smul.u32 16, %s8
      $region24: #{relu_conv1x1.1} parent=19 // pred_fallthru
        _
    $region20: #{relu_conv1x1.1} parent=5 // pred_fallthru
      _
    %p113 = scmp.le.s32.totalorder 1, %s8
    %p114 = scmp.lt.s32.totalorder %s8, 5
    %p115 = pnand %p113, %p114
    %p116 = pneg %p115
    // Predicated region
    $region25: #{relu_conv1x1.1} parent=5 // pred_check
      _
    $region26: #{relu_conv1x1.1} parent=5 // pred_check_branch
      %118 = sbr.rel (%p115) target = $region28
    $region27: #{relu_conv1x1.1} parent=5 // pred_region
      %s119 = ssub.s32 %s8, 1
      %s120 = smul.u32 16, %s13
      %p121 = scmp.lt.s32.totalorder %s120, 63
      %s122 = scalar_select %p121, %s120, 63
      %s123 = smul.addr %s122, 16
      %s124 = smul.addr %s123, 8
      %s125 = scalar_lea.vmem %s0, %s124
      %p126 = pneg %p34
      %p127 = pneg %p31
      %p128 = pneg %p55
      %p129 = pneg %p52
      %p130 = pneg %p81
      %p131 = pneg %p78
      %s132 = smul.u32 16, %s13
      %p133 = scmp.lt.s32.totalorder %s132, 63
      %s134 = scalar_select %p133, %s132, 63
      %s135 = smul.addr %s134, 8
      %s136 = scalar_lea.vmem %s2, %s135
      %s137 = smul.u32 16, %s13
      %p138 = scmp.lt.s32.totalorder %s137, 63
      %s139 = scalar_select %p138, %s137, 63
      %s140 = smul.addr %s139, 16
      %s141 = smul.addr %s140, 8
      %s142 = scalar_lea.vmem %s0, %s141
      %s143 = smul.u32 16, %s13
      %s144 = smul.u32 16, %s13
      %p145 = scmp.lt.s32.totalorder %s144, 63
      %s146 = scalar_select %p145, %s144, 63
      %s147 = smul.addr %s146, 8
      %s148 = scalar_lea.vmem %s2, %s147
      %s149 = smul.u32 16, %s13
      %v150 = vld [vmem:[%s1] sm:$0xff]
      %v151 = vld [vmem:[%s1 + $0x8] sm:$0xff]
      %v152 = vld [vmem:[%s1 + $0x10] sm:$0xff]
      %v153 = vld [vmem:[%s1 + $0x18] sm:$0xff]
      %v154 = vld [vmem:[%s1 + $0x20] sm:$0xff]
      %v155 = vld [vmem:[%s1 + $0x28] sm:$0xff]
      %v156 = vld [vmem:[%s1 + $0x30] sm:$0xff]
      %v157 = vld [vmem:[%s1 + $0x38] sm:$0xff]
      %v158 = vld [vmem:[%s1 + $0x40] sm:$0xff]
      %v159 = vld [vmem:[%s1 + $0x48] sm:$0xff]
      %v160 = vld [vmem:[%s1 + $0x50] sm:$0xff]
      %v161 = vld [vmem:[%s1 + $0x58] sm:$0xff]
      %v162 = vld [vmem:[%s1 + $0x60] sm:$0xff]
      %v163 = vld [vmem:[%s1 + $0x68] sm:$0xff]
      %v164 = vld [vmem:[%s1 + $0x70] sm:$0xff]
      %v165 = vld [vmem:[%s1 + $0x78] sm:$0xff]
      %v166 = vld [vmem:[%s1 + $0x80] sm:$0xff]
      %v167 = vld [vmem:[%s1 + $0x88] sm:$0xff]
      %v168 = vld [vmem:[%s1 + $0x90] sm:$0xff]
      %v169 = vld [vmem:[%s1 + $0x98] sm:$0xff]
      %v170 = vld [vmem:[%s1 + $0xa0] sm:$0xff]
      %v171 = vld [vmem:[%s1 + $0xa8] sm:$0xff]
      %v172 = vld [vmem:[%s1 + $0xb0] sm:$0xff]
      %v173 = vld [vmem:[%s1 + $0xb8] sm:$0xff]
      %v174 = vld [vmem:[%s1 + $0xc0] sm:$0xff]
      %v175 = vld [vmem:[%s1 + $0xc8] sm:$0xff]
      %v176 = vld [vmem:[%s1 + $0xd0] sm:$0xff]
      %v177 = vld [vmem:[%s1 + $0xd8] sm:$0xff]
      %v178 = vld [vmem:[%s1 + $0xe0] sm:$0xff]
      %v179 = vld [vmem:[%s1 + $0xe8] sm:$0xff]
      %v180 = vld [vmem:[%s1 + $0xf0] sm:$0xff]
      %v181 = vld [vmem:[%s1 + $0xf8] sm:$0xff]
      %v182 = vld [vmem:[%s1 + $0x100] sm:$0xff]
      %v183 = vld [vmem:[%s1 + $0x108] sm:$0xff]
      %v184 = vld [vmem:[%s1 + $0x110] sm:$0xff]
      %v185 = vld [vmem:[%s1 + $0x118] sm:$0xff]
      %v186 = vld [vmem:[%s1 + $0x120] sm:$0xff]
      %v187 = vld [vmem:[%s1 + $0x128] sm:$0xff]
      %v188 = vld [vmem:[%s1 + $0x130] sm:$0xff]
      %v189 = vld [vmem:[%s1 + $0x138] sm:$0xff]
      %v190 = vld [vmem:[%s1 + $0x140] sm:$0xff]
      %v191 = vld [vmem:[%s1 + $0x148] sm:$0xff]
      %v192 = vld [vmem:[%s1 + $0x150] sm:$0xff]
      %v193 = vld [vmem:[%s1 + $0x158] sm:$0xff]
      %v194 = vld [vmem:[%s1 + $0x160] sm:$0xff]
      %v195 = vld [vmem:[%s1 + $0x168] sm:$0xff]
      %v196 = vld [vmem:[%s1 + $0x170] sm:$0xff]
      %v197 = vld [vmem:[%s1 + $0x178] sm:$0xff]
      %v198 = vld [vmem:[%s1 + $0x180] sm:$0xff]
      %v199 = vld [vmem:[%s1 + $0x188] sm:$0xff]
      %v200 = vld [vmem:[%s1 + $0x190] sm:$0xff]
      %v201 = vld [vmem:[%s1 + $0x198] sm:$0xff]
      %v202 = vld [vmem:[%s1 + $0x1a0] sm:$0xff]
      %v203 = vld [vmem:[%s1 + $0x1a8] sm:$0xff]
      %v204 = vld [vmem:[%s1 + $0x1b0] sm:$0xff]
      %v205 = vld [vmem:[%s1 + $0x1b8] sm:$0xff]
      %v206 = vld [vmem:[%s1 + $0x1c0] sm:$0xff]
      %v207 = vld [vmem:[%s1 + $0x1c8] sm:$0xff]
      %v208 = vld [vmem:[%s1 + $0x1d0] sm:$0xff]
      %v209 = vld [vmem:[%s1 + $0x1d8] sm:$0xff]
      %v210 = vld [vmem:[%s1 + $0x1e0] sm:$0xff]
      %v211 = vld [vmem:[%s1 + $0x1e8] sm:$0xff]
      %v212 = vld [vmem:[%s1 + $0x1f0] sm:$0xff]
      %v213 = vld [vmem:[%s1 + $0x1f8] sm:$0xff]
      %v214 = vld [vmem:[%s1 + $0x200] sm:$0xff]
      %v215 = vld [vmem:[%s1 + $0x208] sm:$0xff]
      %v216 = vld [vmem:[%s1 + $0x210] sm:$0xff]
      %v217 = vld [vmem:[%s1 + $0x218] sm:$0xff]
      %v218 = vld [vmem:[%s1 + $0x220] sm:$0xff]
      %v219 = vld [vmem:[%s1 + $0x228] sm:$0xff]
      %v220 = vld [vmem:[%s1 + $0x230] sm:$0xff]
      %v221 = vld [vmem:[%s1 + $0x238] sm:$0xff]
      %v222 = vld [vmem:[%s1 + $0x240] sm:$0xff]
      %v223 = vld [vmem:[%s1 + $0x248] sm:$0xff]
      %v224 = vld [vmem:[%s1 + $0x250] sm:$0xff]
      %v225 = vld [vmem:[%s1 + $0x258] sm:$0xff]
      %v226 = vld [vmem:[%s1 + $0x260] sm:$0xff]
      %v227 = vld [vmem:[%s1 + $0x268] sm:$0xff]
      %v228 = vld [vmem:[%s1 + $0x270] sm:$0xff]
      %v229 = vld [vmem:[%s1 + $0x278] sm:$0xff]
      %v230 = vld [vmem:[%s1 + $0x280] sm:$0xff]
      %v231 = vld [vmem:[%s1 + $0x288] sm:$0xff]
      %v232 = vld [vmem:[%s1 + $0x290] sm:$0xff]
      %v233 = vld [vmem:[%s1 + $0x298] sm:$0xff]
      %v234 = vld [vmem:[%s1 + $0x2a0] sm:$0xff]
      %v235 = vld [vmem:[%s1 + $0x2a8] sm:$0xff]
      %v236 = vld [vmem:[%s1 + $0x2b0] sm:$0xff]
      %v237 = vld [vmem:[%s1 + $0x2b8] sm:$0xff]
      %v238 = vld [vmem:[%s1 + $0x2c0] sm:$0xff]
      %v239 = vld [vmem:[%s1 + $0x2c8] sm:$0xff]
      %v240 = vld [vmem:[%s1 + $0x2d0] sm:$0xff]
      %v241 = vld [vmem:[%s1 + $0x2d8] sm:$0xff]
      %v242 = vld [vmem:[%s1 + $0x2e0] sm:$0xff]
      %v243 = vld [vmem:[%s1 + $0x2e8] sm:$0xff]
      %v244 = vld [vmem:[%s1 + $0x2f0] sm:$0xff]
      %v245 = vld [vmem:[%s1 + $0x2f8] sm:$0xff]
      %v246 = vld [vmem:[%s1 + $0x300] sm:$0xff]
      %v247 = vld [vmem:[%s1 + $0x308] sm:$0xff]
      %v248 = vld [vmem:[%s1 + $0x310] sm:$0xff]
      %v249 = vld [vmem:[%s1 + $0x318] sm:$0xff]
      %v250 = vld [vmem:[%s1 + $0x320] sm:$0xff]
      %v251 = vld [vmem:[%s1 + $0x328] sm:$0xff]
      %v252 = vld [vmem:[%s1 + $0x330] sm:$0xff]
      %v253 = vld [vmem:[%s1 + $0x338] sm:$0xff]
      %v254 = vld [vmem:[%s1 + $0x340] sm:$0xff]
      %v255 = vld [vmem:[%s1 + $0x348] sm:$0xff]
      %v256 = vld [vmem:[%s1 + $0x350] sm:$0xff]
      %v257 = vld [vmem:[%s1 + $0x358] sm:$0xff]
      %v258 = vld [vmem:[%s1 + $0x360] sm:$0xff]
      %v259 = vld [vmem:[%s1 + $0x368] sm:$0xff]
      %v260 = vld [vmem:[%s1 + $0x370] sm:$0xff]
      %v261 = vld [vmem:[%s1 + $0x378] sm:$0xff]
      %v262 = vld [vmem:[%s1 + $0x380] sm:$0xff]
      %v263 = vld [vmem:[%s1 + $0x388] sm:$0xff]
      %v264 = vld [vmem:[%s1 + $0x390] sm:$0xff]
      %v265 = vld [vmem:[%s1 + $0x398] sm:$0xff]
      %v266 = vld [vmem:[%s1 + $0x3a0] sm:$0xff]
      %v267 = vld [vmem:[%s1 + $0x3a8] sm:$0xff]
      %v268 = vld [vmem:[%s1 + $0x3b0] sm:$0xff]
      %v269 = vld [vmem:[%s1 + $0x3b8] sm:$0xff]
      %v270 = vld [vmem:[%s1 + $0x3c0] sm:$0xff]
      %v271 = vld [vmem:[%s1 + $0x3c8] sm:$0xff]
      %v272 = vld [vmem:[%s1 + $0x3d0] sm:$0xff]
      %v273 = vld [vmem:[%s1 + $0x3d8] sm:$0xff]
      %v274 = vld [vmem:[%s1 + $0x3e0] sm:$0xff]
      %v275 = vld [vmem:[%s1 + $0x3e8] sm:$0xff]
      %v276 = vld [vmem:[%s1 + $0x3f0] sm:$0xff]
      %v277 = vld [vmem:[%s1 + $0x3f8] sm:$0xff]
      %v278 = vld [vmem:[%s1 + $0x400] sm:$0xff]
      %v279 = vld [vmem:[%s1 + $0x408] sm:$0xff]
      %v280 = vld [vmem:[%s1 + $0x410] sm:$0xff]
      %v281 = vld [vmem:[%s1 + $0x418] sm:$0xff]
      %v282 = vld [vmem:[%s1 + $0x420] sm:$0xff]
      %v283 = vld [vmem:[%s1 + $0x428] sm:$0xff]
      %v284 = vld [vmem:[%s1 + $0x430] sm:$0xff]
      %v285 = vld [vmem:[%s1 + $0x438] sm:$0xff]
      %v286 = vld [vmem:[%s1 + $0x440] sm:$0xff]
      %v287 = vld [vmem:[%s1 + $0x448] sm:$0xff]
      %v288 = vld [vmem:[%s1 + $0x450] sm:$0xff]
      %v289 = vld [vmem:[%s1 + $0x458] sm:$0xff]
      %v290 = vld [vmem:[%s1 + $0x460] sm:$0xff]
      %v291 = vld [vmem:[%s1 + $0x468] sm:$0xff]
      %v292 = vld [vmem:[%s1 + $0x470] sm:$0xff]
      %v293 = vld [vmem:[%s1 + $0x478] sm:$0xff]
      %v294 = vld [vmem:[%s1 + $0x480] sm:$0xff]
      %v295 = vld [vmem:[%s1 + $0x488] sm:$0xff]
      %v296 = vld [vmem:[%s1 + $0x490] sm:$0xff]
      %v297 = vld [vmem:[%s1 + $0x498] sm:$0xff]
      %v298 = vld [vmem:[%s1 + $0x4a0] sm:$0xff]
      %v299 = vld [vmem:[%s1 + $0x4a8] sm:$0xff]
      %v300 = vld [vmem:[%s1 + $0x4b0] sm:$0xff]
      %v301 = vld [vmem:[%s1 + $0x4b8] sm:$0xff]
      %v302 = vld [vmem:[%s1 + $0x4c0] sm:$0xff]
      %v303 = vld [vmem:[%s1 + $0x4c8] sm:$0xff]
      %v304 = vld [vmem:[%s1 + $0x4d0] sm:$0xff]
      %v305 = vld [vmem:[%s1 + $0x4d8] sm:$0xff]
      %v306 = vld [vmem:[%s1 + $0x4e0] sm:$0xff]
      %v307 = vld [vmem:[%s1 + $0x4e8] sm:$0xff]
      %v308 = vld [vmem:[%s1 + $0x4f0] sm:$0xff]
      %v309 = vld [vmem:[%s1 + $0x4f8] sm:$0xff]
      %v310 = vld [vmem:[%s1 + $0x500] sm:$0xff]
      %v311 = vld [vmem:[%s1 + $0x508] sm:$0xff]
      %v312 = vld [vmem:[%s1 + $0x510] sm:$0xff]
      %v313 = vld [vmem:[%s1 + $0x518] sm:$0xff]
      %v314 = vld [vmem:[%s1 + $0x520] sm:$0xff]
      %v315 = vld [vmem:[%s1 + $0x528] sm:$0xff]
      %v316 = vld [vmem:[%s1 + $0x530] sm:$0xff]
      %v317 = vld [vmem:[%s1 + $0x538] sm:$0xff]
      %v318 = vld [vmem:[%s1 + $0x540] sm:$0xff]
      %v319 = vld [vmem:[%s1 + $0x548] sm:$0xff]
      %v320 = vld [vmem:[%s1 + $0x550] sm:$0xff]
      %v321 = vld [vmem:[%s1 + $0x558] sm:$0xff]
      %v322 = vld [vmem:[%s1 + $0x560] sm:$0xff]
      %v323 = vld [vmem:[%s1 + $0x568] sm:$0xff]
      %v324 = vld [vmem:[%s1 + $0x570] sm:$0xff]
      %v325 = vld [vmem:[%s1 + $0x578] sm:$0xff]
      %v326 = vld [vmem:[%s1 + $0x580] sm:$0xff]
      %v327 = vld [vmem:[%s1 + $0x588] sm:$0xff]
      %v328 = vld [vmem:[%s1 + $0x590] sm:$0xff]
      %v329 = vld [vmem:[%s1 + $0x598] sm:$0xff]
      %v330 = vld [vmem:[%s1 + $0x5a0] sm:$0xff]
      %v331 = vld [vmem:[%s1 + $0x5a8] sm:$0xff]
      %v332 = vld [vmem:[%s1 + $0x5b0] sm:$0xff]
      %v333 = vld [vmem:[%s1 + $0x5b8] sm:$0xff]
      %v334 = vld [vmem:[%s1 + $0x5c0] sm:$0xff]
      %v335 = vld [vmem:[%s1 + $0x5c8] sm:$0xff]
      %v336 = vld [vmem:[%s1 + $0x5d0] sm:$0xff]
      %v337 = vld [vmem:[%s1 + $0x5d8] sm:$0xff]
      %v338 = vld [vmem:[%s1 + $0x5e0] sm:$0xff]
      %v339 = vld [vmem:[%s1 + $0x5e8] sm:$0xff]
      %v340 = vld [vmem:[%s1 + $0x5f0] sm:$0xff]
      %v341 = vld [vmem:[%s1 + $0x5f8] sm:$0xff]
      %v342 = vld [vmem:[%s1 + $0x600] sm:$0xff]
      %v343 = vld [vmem:[%s1 + $0x608] sm:$0xff]
      %v344 = vld [vmem:[%s1 + $0x610] sm:$0xff]
      %v345 = vld [vmem:[%s1 + $0x618] sm:$0xff]
      %v346 = vld [vmem:[%s1 + $0x620] sm:$0xff]
      %v347 = vld [vmem:[%s1 + $0x628] sm:$0xff]
      %v348 = vld [vmem:[%s1 + $0x630] sm:$0xff]
      %v349 = vld [vmem:[%s1 + $0x638] sm:$0xff]
      %v350 = vld [vmem:[%s1 + $0x640] sm:$0xff]
      %v351 = vld [vmem:[%s1 + $0x648] sm:$0xff]
      %v352 = vld [vmem:[%s1 + $0x650] sm:$0xff]
      %v353 = vld [vmem:[%s1 + $0x658] sm:$0xff]
      %v354 = vld [vmem:[%s1 + $0x660] sm:$0xff]
      %v355 = vld [vmem:[%s1 + $0x668] sm:$0xff]
      %v356 = vld [vmem:[%s1 + $0x670] sm:$0xff]
      %v357 = vld [vmem:[%s1 + $0x678] sm:$0xff]
      %v358 = vld [vmem:[%s1 + $0x680] sm:$0xff]
      %v359 = vld [vmem:[%s1 + $0x688] sm:$0xff]
      %v360 = vld [vmem:[%s1 + $0x690] sm:$0xff]
      %v361 = vld [vmem:[%s1 + $0x698] sm:$0xff]
      %v362 = vld [vmem:[%s1 + $0x6a0] sm:$0xff]
      %v363 = vld [vmem:[%s1 + $0x6a8] sm:$0xff]
      %v364 = vld [vmem:[%s1 + $0x6b0] sm:$0xff]
      %v365 = vld [vmem:[%s1 + $0x6b8] sm:$0xff]
      %v366 = vld [vmem:[%s1 + $0x6c0] sm:$0xff]
      %v367 = vld [vmem:[%s1 + $0x6c8] sm:$0xff]
      %v368 = vld [vmem:[%s1 + $0x6d0] sm:$0xff]
      %v369 = vld [vmem:[%s1 + $0x6d8] sm:$0xff]
      %v370 = vld [vmem:[%s1 + $0x6e0] sm:$0xff]
      %v371 = vld [vmem:[%s1 + $0x6e8] sm:$0xff]
      %v372 = vld [vmem:[%s1 + $0x6f0] sm:$0xff]
      %v373 = vld [vmem:[%s1 + $0x6f8] sm:$0xff]
      %v374 = vld [vmem:[%s1 + $0x700] sm:$0xff]
      %v375 = vld [vmem:[%s1 + $0x708] sm:$0xff]
      %v376 = vld [vmem:[%s1 + $0x710] sm:$0xff]
      %v377 = vld [vmem:[%s1 + $0x718] sm:$0xff]
      %v378 = vld [vmem:[%s1 + $0x720] sm:$0xff]
      %v379 = vld [vmem:[%s1 + $0x728] sm:$0xff]
      %v380 = vld [vmem:[%s1 + $0x730] sm:$0xff]
      %v381 = vld [vmem:[%s1 + $0x738] sm:$0xff]
      %v382 = vld [vmem:[%s1 + $0x740] sm:$0xff]
      %v383 = vld [vmem:[%s1 + $0x748] sm:$0xff]
      %v384 = vld [vmem:[%s1 + $0x750] sm:$0xff]
      %v385 = vld [vmem:[%s1 + $0x758] sm:$0xff]
      %v386 = vld [vmem:[%s1 + $0x760] sm:$0xff]
      %v387 = vld [vmem:[%s1 + $0x768] sm:$0xff]
      %v388 = vld [vmem:[%s1 + $0x770] sm:$0xff]
      %v389 = vld [vmem:[%s1 + $0x778] sm:$0xff]
      %v390 = vld [vmem:[%s1 + $0x780] sm:$0xff]
      %v391 = vld [vmem:[%s1 + $0x788] sm:$0xff]
      %v392 = vld [vmem:[%s1 + $0x790] sm:$0xff]
      %v393 = vld [vmem:[%s1 + $0x798] sm:$0xff]
      %v394 = vld [vmem:[%s1 + $0x7a0] sm:$0xff]
      %v395 = vld [vmem:[%s1 + $0x7a8] sm:$0xff]
      %v396 = vld [vmem:[%s1 + $0x7b0] sm:$0xff]
      %v397 = vld [vmem:[%s1 + $0x7b8] sm:$0xff]
      %v398 = vld [vmem:[%s1 + $0x7c0] sm:$0xff]
      %v399 = vld [vmem:[%s1 + $0x7c8] sm:$0xff]
      %v400 = vld [vmem:[%s1 + $0x7d0] sm:$0xff]
      %v401 = vld [vmem:[%s1 + $0x7d8] sm:$0xff]
      %v402 = vld [vmem:[%s1 + $0x7e0] sm:$0xff]
      %v403 = vld [vmem:[%s1 + $0x7e8] sm:$0xff]
      %v404 = vld [vmem:[%s1 + $0x7f0] sm:$0xff]
      %v405 = vld [vmem:[%s1 + $0x7f8] sm:$0xff]
      %v406 = vmax.f32 %v150, 0.0
      %v407 = vmax.f32 %v151, 0.0
      %v408 = vmax.f32 %v152, 0.0
      %v409 = vmax.f32 %v153, 0.0
      %v410 = vmax.f32 %v154, 0.0
      %v411 = vmax.f32 %v155, 0.0
      %v412 = vmax.f32 %v156, 0.0
      %v413 = vmax.f32 %v157, 0.0
      %v414 = vmax.f32 %v158, 0.0
      %v415 = vmax.f32 %v159, 0.0
      %v416 = vmax.f32 %v160, 0.0
      %v417 = vmax.f32 %v161, 0.0
      %v418 = vmax.f32 %v162, 0.0
      %v419 = vmax.f32 %v163, 0.0
      %v420 = vmax.f32 %v164, 0.0
      %v421 = vmax.f32 %v165, 0.0
      %v422 = vmax.f32 %v166, 0.0
      %v423 = vmax.f32 %v167, 0.0
      %v424 = vmax.f32 %v168, 0.0
      %v425 = vmax.f32 %v169, 0.0
      %v426 = vmax.f32 %v170, 0.0
      %v427 = vmax.f32 %v171, 0.0
      %v428 = vmax.f32 %v172, 0.0
      %v429 = vmax.f32 %v173, 0.0
      %v430 = vmax.f32 %v174, 0.0
      %v431 = vmax.f32 %v175, 0.0
      %v432 = vmax.f32 %v176, 0.0
      %v433 = vmax.f32 %v177, 0.0
      %v434 = vmax.f32 %v178, 0.0
      %v435 = vmax.f32 %v179, 0.0
      %v436 = vmax.f32 %v180, 0.0
      %v437 = vmax.f32 %v181, 0.0
      %v438 = vmax.f32 %v182, 0.0
      %v439 = vmax.f32 %v183, 0.0
      %v440 = vmax.f32 %v184, 0.0
      %v441 = vmax.f32 %v185, 0.0
      %v442 = vmax.f32 %v186, 0.0
      %v443 = vmax.f32 %v187, 0.0
      %v444 = vmax.f32 %v188, 0.0
      %v445 = vmax.f32 %v189, 0.0
      %v446 = vmax.f32 %v190, 0.0
      %v447 = vmax.f32 %v191, 0.0
      %v448 = vmax.f32 %v192, 0.0
      %v449 = vmax.f32 %v193, 0.0
      %v450 = vmax.f32 %v194, 0.0
      %v451 = vmax.f32 %v195, 0.0
      %v452 = vmax.f32 %v196, 0.0
      %v453 = vmax.f32 %v197, 0.0
      %v454 = vmax.f32 %v198, 0.0
      %v455 = vmax.f32 %v199, 0.0
      %v456 = vmax.f32 %v200, 0.0
      %v457 = vmax.f32 %v201, 0.0
      %v458 = vmax.f32 %v202, 0.0
      %v459 = vmax.f32 %v203, 0.0
      %v460 = vmax.f32 %v204, 0.0
      %v461 = vmax.f32 %v205, 0.0
      %v462 = vmax.f32 %v206, 0.0
      %v463 = vmax.f32 %v207, 0.0
      %v464 = vmax.f32 %v208, 0.0
      %v465 = vmax.f32 %v209, 0.0
      %v466 = vmax.f32 %v210, 0.0
      %v467 = vmax.f32 %v211, 0.0
      %v468 = vmax.f32 %v212, 0.0
      %v469 = vmax.f32 %v213, 0.0
      %v470 = vmax.f32 %v214, 0.0
      %v471 = vmax.f32 %v215, 0.0
      %v472 = vmax.f32 %v216, 0.0
      %v473 = vmax.f32 %v217, 0.0
      %v474 = vmax.f32 %v218, 0.0
      %v475 = vmax.f32 %v219, 0.0
      %v476 = vmax.f32 %v220, 0.0
      %v477 = vmax.f32 %v221, 0.0
      %v478 = vmax.f32 %v222, 0.0
      %v479 = vmax.f32 %v223, 0.0
      %v480 = vmax.f32 %v224, 0.0
      %v481 = vmax.f32 %v225, 0.0
      %v482 = vmax.f32 %v226, 0.0
      %v483 = vmax.f32 %v227, 0.0
      %v484 = vmax.f32 %v228, 0.0
      %v485 = vmax.f32 %v229, 0.0
      %v486 = vmax.f32 %v230, 0.0
      %v487 = vmax.f32 %v231, 0.0
      %v488 = vmax.f32 %v232, 0.0
      %v489 = vmax.f32 %v233, 0.0
      %v490 = vmax.f32 %v234, 0.0
      %v491 = vmax.f32 %v235, 0.0
      %v492 = vmax.f32 %v236, 0.0
      %v493 = vmax.f32 %v237, 0.0
      %v494 = vmax.f32 %v238, 0.0
      %v495 = vmax.f32 %v239, 0.0
      %v496 = vmax.f32 %v240, 0.0
      %v497 = vmax.f32 %v241, 0.0
      %v498 = vmax.f32 %v242, 0.0
      %v499 = vmax.f32 %v243, 0.0
      %v500 = vmax.f32 %v244, 0.0
      %v501 = vmax.f32 %v245, 0.0
      %v502 = vmax.f32 %v246, 0.0
      %v503 = vmax.f32 %v247, 0.0
      %v504 = vmax.f32 %v248, 0.0
      %v505 = vmax.f32 %v249, 0.0
      %v506 = vmax.f32 %v250, 0.0
      %v507 = vmax.f32 %v251, 0.0
      %v508 = vmax.f32 %v252, 0.0
      %v509 = vmax.f32 %v253, 0.0
      %v510 = vmax.f32 %v254, 0.0
      %v511 = vmax.f32 %v255, 0.0
      %v512 = vmax.f32 %v256, 0.0
      %v513 = vmax.f32 %v257, 0.0
      %v514 = vmax.f32 %v258, 0.0
      %v515 = vmax.f32 %v259, 0.0
      %v516 = vmax.f32 %v260, 0.0
      %v517 = vmax.f32 %v261, 0.0
      %v518 = vmax.f32 %v262, 0.0
      %v519 = vmax.f32 %v263, 0.0
      %v520 = vmax.f32 %v264, 0.0
      %v521 = vmax.f32 %v265, 0.0
      %v522 = vmax.f32 %v266, 0.0
      %v523 = vmax.f32 %v267, 0.0
      %v524 = vmax.f32 %v268, 0.0
      %v525 = vmax.f32 %v269, 0.0
      %v526 = vmax.f32 %v270, 0.0
      %v527 = vmax.f32 %v271, 0.0
      %v528 = vmax.f32 %v272, 0.0
      %v529 = vmax.f32 %v273, 0.0
      %v530 = vmax.f32 %v274, 0.0
      %v531 = vmax.f32 %v275, 0.0
      %v532 = vmax.f32 %v276, 0.0
      %v533 = vmax.f32 %v277, 0.0
      %v534 = vmax.f32 %v278, 0.0
      %v535 = vmax.f32 %v279, 0.0
      %v536 = vmax.f32 %v280, 0.0
      %v537 = vmax.f32 %v281, 0.0
      %v538 = vmax.f32 %v282, 0.0
      %v539 = vmax.f32 %v283, 0.0
      %v540 = vmax.f32 %v284, 0.0
      %v541 = vmax.f32 %v285, 0.0
      %v542 = vmax.f32 %v286, 0.0
      %v543 = vmax.f32 %v287, 0.0
      %v544 = vmax.f32 %v288, 0.0
      %v545 = vmax.f32 %v289, 0.0
      %v546 = vmax.f32 %v290, 0.0
      %v547 = vmax.f32 %v291, 0.0
      %v548 = vmax.f32 %v292, 0.0
      %v549 = vmax.f32 %v293, 0.0
      %v550 = vmax.f32 %v294, 0.0
      %v551 = vmax.f32 %v295, 0.0
      %v552 = vmax.f32 %v296, 0.0
      %v553 = vmax.f32 %v297, 0.0
      %v554 = vmax.f32 %v298, 0.0
      %v555 = vmax.f32 %v299, 0.0
      %v556 = vmax.f32 %v300, 0.0
      %v557 = vmax.f32 %v301, 0.0
      %v558 = vmax.f32 %v302, 0.0
      %v559 = vmax.f32 %v303, 0.0
      %v560 = vmax.f32 %v304, 0.0
      %v561 = vmax.f32 %v305, 0.0
      %v562 = vmax.f32 %v306, 0.0
      %v563 = vmax.f32 %v307, 0.0
      %v564 = vmax.f32 %v308, 0.0
      %v565 = vmax.f32 %v309, 0.0
      %v566 = vmax.f32 %v310, 0.0
      %v567 = vmax.f32 %v311, 0.0
      %v568 = vmax.f32 %v312, 0.0
      %v569 = vmax.f32 %v313, 0.0
      %v570 = vmax.f32 %v314, 0.0
      %v571 = vmax.f32 %v315, 0.0
      %v572 = vmax.f32 %v316, 0.0
      %v573 = vmax.f32 %v317, 0.0
      %v574 = vmax.f32 %v318, 0.0
      %v575 = vmax.f32 %v319, 0.0
      %v576 = vmax.f32 %v320, 0.0
      %v577 = vmax.f32 %v321, 0.0
      %v578 = vmax.f32 %v322, 0.0
      %v579 = vmax.f32 %v323, 0.0
      %v580 = vmax.f32 %v324, 0.0
      %v581 = vmax.f32 %v325, 0.0
      %v582 = vmax.f32 %v326, 0.0
      %v583 = vmax.f32 %v327, 0.0
      %v584 = vmax.f32 %v328, 0.0
      %v585 = vmax.f32 %v329, 0.0
      %v586 = vmax.f32 %v330, 0.0
      %v587 = vmax.f32 %v331, 0.0
      %v588 = vmax.f32 %v332, 0.0
      %v589 = vmax.f32 %v333, 0.0
      %v590 = vmax.f32 %v334, 0.0
      %v591 = vmax.f32 %v335, 0.0
      %v592 = vmax.f32 %v336, 0.0
      %v593 = vmax.f32 %v337, 0.0
      %v594 = vmax.f32 %v338, 0.0
      %v595 = vmax.f32 %v339, 0.0
      %v596 = vmax.f32 %v340, 0.0
      %v597 = vmax.f32 %v341, 0.0
      %v598 = vmax.f32 %v342, 0.0
      %v599 = vmax.f32 %v343, 0.0
      %v600 = vmax.f32 %v344, 0.0
      %v601 = vmax.f32 %v345, 0.0
      %v602 = vmax.f32 %v346, 0.0
      %v603 = vmax.f32 %v347, 0.0
      %v604 = vmax.f32 %v348, 0.0
      %v605 = vmax.f32 %v349, 0.0
      %v606 = vmax.f32 %v350, 0.0
      %v607 = vmax.f32 %v351, 0.0
      %v608 = vmax.f32 %v352, 0.0
      %v609 = vmax.f32 %v353, 0.0
      %v610 = vmax.f32 %v354, 0.0
      %v611 = vmax.f32 %v355, 0.0
      %v612 = vmax.f32 %v356, 0.0
      %v613 = vmax.f32 %v357, 0.0
      %v614 = vmax.f32 %v358, 0.0
      %v615 = vmax.f32 %v359, 0.0
      %v616 = vmax.f32 %v360, 0.0
      %v617 = vmax.f32 %v361, 0.0
      %v618 = vmax.f32 %v362, 0.0
      %v619 = vmax.f32 %v363, 0.0
      %v620 = vmax.f32 %v364, 0.0
      %v621 = vmax.f32 %v365, 0.0
      %v622 = vmax.f32 %v366, 0.0
      %v623 = vmax.f32 %v367, 0.0
      %v624 = vmax.f32 %v368, 0.0
      %v625 = vmax.f32 %v369, 0.0
      %v626 = vmax.f32 %v370, 0.0
      %v627 = vmax.f32 %v371, 0.0
      %v628 = vmax.f32 %v372, 0.0
      %v629 = vmax.f32 %v373, 0.0
      %v630 = vmax.f32 %v374, 0.0
      %v631 = vmax.f32 %v375, 0.0
      %v632 = vmax.f32 %v376, 0.0
      %v633 = vmax.f32 %v377, 0.0
      %v634 = vmax.f32 %v378, 0.0
      %v635 = vmax.f32 %v379, 0.0
      %v636 = vmax.f32 %v380, 0.0
      %v637 = vmax.f32 %v381, 0.0
      %v638 = vmax.f32 %v382, 0.0
      %v639 = vmax.f32 %v383, 0.0
      %v640 = vmax.f32 %v384, 0.0
      %v641 = vmax.f32 %v385, 0.0
      %v642 = vmax.f32 %v386, 0.0
      %v643 = vmax.f32 %v387, 0.0
      %v644 = vmax.f32 %v388, 0.0
      %v645 = vmax.f32 %v389, 0.0
      %v646 = vmax.f32 %v390, 0.0
      %v647 = vmax.f32 %v391, 0.0
      %v648 = vmax.f32 %v392, 0.0
      %v649 = vmax.f32 %v393, 0.0
      %v650 = vmax.f32 %v394, 0.0
      %v651 = vmax.f32 %v395, 0.0
      %v652 = vmax.f32 %v396, 0.0
      %v653 = vmax.f32 %v397, 0.0
      %v654 = vmax.f32 %v398, 0.0
      %v655 = vmax.f32 %v399, 0.0
      %v656 = vmax.f32 %v400, 0.0
      %v657 = vmax.f32 %v401, 0.0
      %v658 = vmax.f32 %v402, 0.0
      %v659 = vmax.f32 %v403, 0.0
      %v660 = vmax.f32 %v404, 0.0
      %v661 = vmax.f32 %v405, 0.0
      %v662 = vld [vmem:[%s142] sm:$0xff]
      %v663 = vld [vmem:[%s142 + $0x8] sm:$0xff]
      %v664 = vld [vmem:[%s142 + $0x10] sm:$0xff]
      %v665 = vld [vmem:[%s142 + $0x18] sm:$0xff]
      %v666 = vld [vmem:[%s142 + $0x20] sm:$0xff]
      %v667 = vld [vmem:[%s142 + $0x28] sm:$0xff]
      %v668 = vld [vmem:[%s142 + $0x30] sm:$0xff]
      %v669 = vld [vmem:[%s142 + $0x38] sm:$0xff]
      %v670 = vld [vmem:[%s142 + $0x40] sm:$0xff]
      %v671 = vld [vmem:[%s142 + $0x48] sm:$0xff]
      %v672 = vld [vmem:[%s142 + $0x50] sm:$0xff]
      %v673 = vld [vmem:[%s142 + $0x58] sm:$0xff]
      %v674 = vld [vmem:[%s142 + $0x60] sm:$0xff]
      %v675 = vld [vmem:[%s142 + $0x68] sm:$0xff]
      %v676 = vld [vmem:[%s142 + $0x70] sm:$0xff]
      %v677 = vld [vmem:[%s142 + $0x78] sm:$0xff]
      %v678 = vld [vmem:[%s142 + $0x80] sm:$0xff]
      %v679 = vld [vmem:[%s142 + $0x88] sm:$0xff]
      %v680 = vld [vmem:[%s142 + $0x90] sm:$0xff]
      %v681 = vld [vmem:[%s142 + $0x98] sm:$0xff]
      %v682 = vld [vmem:[%s142 + $0xa0] sm:$0xff]
      %v683 = vld [vmem:[%s142 + $0xa8] sm:$0xff]
      %v684 = vld [vmem:[%s142 + $0xb0] sm:$0xff]
      %v685 = vld [vmem:[%s142 + $0xb8] sm:$0xff]
      %v686 = vld [vmem:[%s142 + $0xc0] sm:$0xff]
      %v687 = vld [vmem:[%s142 + $0xc8] sm:$0xff]
      %v688 = vld [vmem:[%s142 + $0xd0] sm:$0xff]
      %v689 = vld [vmem:[%s142 + $0xd8] sm:$0xff]
      %v690 = vld [vmem:[%s142 + $0xe0] sm:$0xff]
      %v691 = vld [vmem:[%s142 + $0xe8] sm:$0xff]
      %v692 = vld [vmem:[%s142 + $0xf0] sm:$0xff]
      %v693 = vld [vmem:[%s142 + $0xf8] sm:$0xff]
      %v694 = vld [vmem:[%s142 + $0x100] sm:$0xff]
      %v695 = vld [vmem:[%s142 + $0x108] sm:$0xff]
      %v696 = vld [vmem:[%s142 + $0x110] sm:$0xff]
      %v697 = vld [vmem:[%s142 + $0x118] sm:$0xff]
      %v698 = vld [vmem:[%s142 + $0x120] sm:$0xff]
      %v699 = vld [vmem:[%s142 + $0x128] sm:$0xff]
      %v700 = vld [vmem:[%s142 + $0x130] sm:$0xff]
      %v701 = vld [vmem:[%s142 + $0x138] sm:$0xff]
      %v702 = vld [vmem:[%s142 + $0x140] sm:$0xff]
      %v703 = vld [vmem:[%s142 + $0x148] sm:$0xff]
      %v704 = vld [vmem:[%s142 + $0x150] sm:$0xff]
      %v705 = vld [vmem:[%s142 + $0x158] sm:$0xff]
      %v706 = vld [vmem:[%s142 + $0x160] sm:$0xff]
      %v707 = vld [vmem:[%s142 + $0x168] sm:$0xff]
      %v708 = vld [vmem:[%s142 + $0x170] sm:$0xff]
      %v709 = vld [vmem:[%s142 + $0x178] sm:$0xff]
      %v710 = vld [vmem:[%s142 + $0x180] sm:$0xff]
      %v711 = vld [vmem:[%s142 + $0x188] sm:$0xff]
      %v712 = vld [vmem:[%s142 + $0x190] sm:$0xff]
      %v713 = vld [vmem:[%s142 + $0x198] sm:$0xff]
      %v714 = vld [vmem:[%s142 + $0x1a0] sm:$0xff]
      %v715 = vld [vmem:[%s142 + $0x1a8] sm:$0xff]
      %v716 = vld [vmem:[%s142 + $0x1b0] sm:$0xff]
      %v717 = vld [vmem:[%s142 + $0x1b8] sm:$0xff]
      %v718 = vld [vmem:[%s142 + $0x1c0] sm:$0xff]
      %v719 = vld [vmem:[%s142 + $0x1c8] sm:$0xff]
      %v720 = vld [vmem:[%s142 + $0x1d0] sm:$0xff]
      %v721 = vld [vmem:[%s142 + $0x1d8] sm:$0xff]
      %v722 = vld [vmem:[%s142 + $0x1e0] sm:$0xff]
      %v723 = vld [vmem:[%s142 + $0x1e8] sm:$0xff]
      %v724 = vld [vmem:[%s142 + $0x1f0] sm:$0xff]
      %v725 = vld [vmem:[%s142 + $0x1f8] sm:$0xff]
      %v726 = vld [vmem:[%s142 + $0x200] sm:$0xff]
      %v727 = vld [vmem:[%s142 + $0x208] sm:$0xff]
      %v728 = vld [vmem:[%s142 + $0x210] sm:$0xff]
      %v729 = vld [vmem:[%s142 + $0x218] sm:$0xff]
      %v730 = vld [vmem:[%s142 + $0x220] sm:$0xff]
      %v731 = vld [vmem:[%s142 + $0x228] sm:$0xff]
      %v732 = vld [vmem:[%s142 + $0x230] sm:$0xff]
      %v733 = vld [vmem:[%s142 + $0x238] sm:$0xff]
      %v734 = vld [vmem:[%s142 + $0x240] sm:$0xff]
      %v735 = vld [vmem:[%s142 + $0x248] sm:$0xff]
      %v736 = vld [vmem:[%s142 + $0x250] sm:$0xff]
      %v737 = vld [vmem:[%s142 + $0x258] sm:$0xff]
      %v738 = vld [vmem:[%s142 + $0x260] sm:$0xff]
      %v739 = vld [vmem:[%s142 + $0x268] sm:$0xff]
      %v740 = vld [vmem:[%s142 + $0x270] sm:$0xff]
      %v741 = vld [vmem:[%s142 + $0x278] sm:$0xff]
      %v742 = vld [vmem:[%s142 + $0x280] sm:$0xff]
      %v743 = vld [vmem:[%s142 + $0x288] sm:$0xff]
      %v744 = vld [vmem:[%s142 + $0x290] sm:$0xff]
      %v745 = vld [vmem:[%s142 + $0x298] sm:$0xff]
      %v746 = vld [vmem:[%s142 + $0x2a0] sm:$0xff]
      %v747 = vld [vmem:[%s142 + $0x2a8] sm:$0xff]
      %v748 = vld [vmem:[%s142 + $0x2b0] sm:$0xff]
      %v749 = vld [vmem:[%s142 + $0x2b8] sm:$0xff]
      %v750 = vld [vmem:[%s142 + $0x2c0] sm:$0xff]
      %v751 = vld [vmem:[%s142 + $0x2c8] sm:$0xff]
      %v752 = vld [vmem:[%s142 + $0x2d0] sm:$0xff]
      %v753 = vld [vmem:[%s142 + $0x2d8] sm:$0xff]
      %v754 = vld [vmem:[%s142 + $0x2e0] sm:$0xff]
      %v755 = vld [vmem:[%s142 + $0x2e8] sm:$0xff]
      %v756 = vld [vmem:[%s142 + $0x2f0] sm:$0xff]
      %v757 = vld [vmem:[%s142 + $0x2f8] sm:$0xff]
      %v758 = vld [vmem:[%s142 + $0x300] sm:$0xff]
      %v759 = vld [vmem:[%s142 + $0x308] sm:$0xff]
      %v760 = vld [vmem:[%s142 + $0x310] sm:$0xff]
      %v761 = vld [vmem:[%s142 + $0x318] sm:$0xff]
      %v762 = vld [vmem:[%s142 + $0x320] sm:$0xff]
      %v763 = vld [vmem:[%s142 + $0x328] sm:$0xff]
      %v764 = vld [vmem:[%s142 + $0x330] sm:$0xff]
      %v765 = vld [vmem:[%s142 + $0x338] sm:$0xff]
      %v766 = vld [vmem:[%s142 + $0x340] sm:$0xff]
      %v767 = vld [vmem:[%s142 + $0x348] sm:$0xff]
      %v768 = vld [vmem:[%s142 + $0x350] sm:$0xff]
      %v769 = vld [vmem:[%s142 + $0x358] sm:$0xff]
      %v770 = vld [vmem:[%s142 + $0x360] sm:$0xff]
      %v771 = vld [vmem:[%s142 + $0x368] sm:$0xff]
      %v772 = vld [vmem:[%s142 + $0x370] sm:$0xff]
      %v773 = vld [vmem:[%s142 + $0x378] sm:$0xff]
      %v774 = vld [vmem:[%s142 + $0x380] sm:$0xff]
      %v775 = vld [vmem:[%s142 + $0x388] sm:$0xff]
      %v776 = vld [vmem:[%s142 + $0x390] sm:$0xff]
      %v777 = vld [vmem:[%s142 + $0x398] sm:$0xff]
      %v778 = vld [vmem:[%s142 + $0x3a0] sm:$0xff]
      %v779 = vld [vmem:[%s142 + $0x3a8] sm:$0xff]
      %v780 = vld [vmem:[%s142 + $0x3b0] sm:$0xff]
      %v781 = vld [vmem:[%s142 + $0x3b8] sm:$0xff]
      %v782 = vld [vmem:[%s142 + $0x3c0] sm:$0xff]
      %v783 = vld [vmem:[%s142 + $0x3c8] sm:$0xff]
      %v784 = vld [vmem:[%s142 + $0x3d0] sm:$0xff]
      %v785 = vld [vmem:[%s142 + $0x3d8] sm:$0xff]
      %v786 = vld [vmem:[%s142 + $0x3e0] sm:$0xff]
      %v787 = vld [vmem:[%s142 + $0x3e8] sm:$0xff]
      %v788 = vld [vmem:[%s142 + $0x3f0] sm:$0xff]
      %v789 = vld [vmem:[%s142 + $0x3f8] sm:$0xff]
      %v790 = vld [vmem:[%s142 + $0x400] sm:$0xff]
      %v791 = vld [vmem:[%s142 + $0x408] sm:$0xff]
      %v792 = vld [vmem:[%s142 + $0x410] sm:$0xff]
      %v793 = vld [vmem:[%s142 + $0x418] sm:$0xff]
      %v794 = vld [vmem:[%s142 + $0x420] sm:$0xff]
      %v795 = vld [vmem:[%s142 + $0x428] sm:$0xff]
      %v796 = vld [vmem:[%s142 + $0x430] sm:$0xff]
      %v797 = vld [vmem:[%s142 + $0x438] sm:$0xff]
      %v798 = vld [vmem:[%s142 + $0x440] sm:$0xff]
      %v799 = vld [vmem:[%s142 + $0x448] sm:$0xff]
      %v800 = vld [vmem:[%s142 + $0x450] sm:$0xff]
      %v801 = vld [vmem:[%s142 + $0x458] sm:$0xff]
      %v802 = vld [vmem:[%s142 + $0x460] sm:$0xff]
      %v803 = vld [vmem:[%s142 + $0x468] sm:$0xff]
      %v804 = vld [vmem:[%s142 + $0x470] sm:$0xff]
      %v805 = vld [vmem:[%s142 + $0x478] sm:$0xff]
      %v806 = vld [vmem:[%s142 + $0x480] sm:$0xff]
      %v807 = vld [vmem:[%s142 + $0x488] sm:$0xff]
      %v808 = vld [vmem:[%s142 + $0x490] sm:$0xff]
      %v809 = vld [vmem:[%s142 + $0x498] sm:$0xff]
      %v810 = vld [vmem:[%s142 + $0x4a0] sm:$0xff]
      %v811 = vld [vmem:[%s142 + $0x4a8] sm:$0xff]
      %v812 = vld [vmem:[%s142 + $0x4b0] sm:$0xff]
      %v813 = vld [vmem:[%s142 + $0x4b8] sm:$0xff]
      %v814 = vld [vmem:[%s142 + $0x4c0] sm:$0xff]
      %v815 = vld [vmem:[%s142 + $0x4c8] sm:$0xff]
      %v816 = vld [vmem:[%s142 + $0x4d0] sm:$0xff]
      %v817 = vld [vmem:[%s142 + $0x4d8] sm:$0xff]
      %v818 = vld [vmem:[%s142 + $0x4e0] sm:$0xff]
      %v819 = vld [vmem:[%s142 + $0x4e8] sm:$0xff]
      %v820 = vld [vmem:[%s142 + $0x4f0] sm:$0xff]
      %v821 = vld [vmem:[%s142 + $0x4f8] sm:$0xff]
      %v822 = vld [vmem:[%s142 + $0x500] sm:$0xff]
      %v823 = vld [vmem:[%s142 + $0x508] sm:$0xff]
      %v824 = vld [vmem:[%s142 + $0x510] sm:$0xff]
      %v825 = vld [vmem:[%s142 + $0x518] sm:$0xff]
      %v826 = vld [vmem:[%s142 + $0x520] sm:$0xff]
      %v827 = vld [vmem:[%s142 + $0x528] sm:$0xff]
      %v828 = vld [vmem:[%s142 + $0x530] sm:$0xff]
      %v829 = vld [vmem:[%s142 + $0x538] sm:$0xff]
      %v830 = vld [vmem:[%s142 + $0x540] sm:$0xff]
      %v831 = vld [vmem:[%s142 + $0x548] sm:$0xff]
      %v832 = vld [vmem:[%s142 + $0x550] sm:$0xff]
      %v833 = vld [vmem:[%s142 + $0x558] sm:$0xff]
      %v834 = vld [vmem:[%s142 + $0x560] sm:$0xff]
      %v835 = vld [vmem:[%s142 + $0x568] sm:$0xff]
      %v836 = vld [vmem:[%s142 + $0x570] sm:$0xff]
      %v837 = vld [vmem:[%s142 + $0x578] sm:$0xff]
      %v838 = vld [vmem:[%s142 + $0x580] sm:$0xff]
      %v839 = vld [vmem:[%s142 + $0x588] sm:$0xff]
      %v840 = vld [vmem:[%s142 + $0x590] sm:$0xff]
      %v841 = vld [vmem:[%s142 + $0x598] sm:$0xff]
      %v842 = vld [vmem:[%s142 + $0x5a0] sm:$0xff]
      %v843 = vld [vmem:[%s142 + $0x5a8] sm:$0xff]
      %v844 = vld [vmem:[%s142 + $0x5b0] sm:$0xff]
      %v845 = vld [vmem:[%s142 + $0x5b8] sm:$0xff]
      %v846 = vld [vmem:[%s142 + $0x5c0] sm:$0xff]
      %v847 = vld [vmem:[%s142 + $0x5c8] sm:$0xff]
      %v848 = vld [vmem:[%s142 + $0x5d0] sm:$0xff]
      %v849 = vld [vmem:[%s142 + $0x5d8] sm:$0xff]
      %v850 = vld [vmem:[%s142 + $0x5e0] sm:$0xff]
      %v851 = vld [vmem:[%s142 + $0x5e8] sm:$0xff]
      %v852 = vld [vmem:[%s142 + $0x5f0] sm:$0xff]
      %v853 = vld [vmem:[%s142 + $0x5f8] sm:$0xff]
      %v854 = vld [vmem:[%s142 + $0x600] sm:$0xff]
      %v855 = vld [vmem:[%s142 + $0x608] sm:$0xff]
      %v856 = vld [vmem:[%s142 + $0x610] sm:$0xff]
      %v857 = vld [vmem:[%s142 + $0x618] sm:$0xff]
      %v858 = vld [vmem:[%s142 + $0x620] sm:$0xff]
      %v859 = vld [vmem:[%s142 + $0x628] sm:$0xff]
      %v860 = vld [vmem:[%s142 + $0x630] sm:$0xff]
      %v861 = vld [vmem:[%s142 + $0x638] sm:$0xff]
      %v862 = vld [vmem:[%s142 + $0x640] sm:$0xff]
      %v863 = vld [vmem:[%s142 + $0x648] sm:$0xff]
      %v864 = vld [vmem:[%s142 + $0x650] sm:$0xff]
      %v865 = vld [vmem:[%s142 + $0x658] sm:$0xff]
      %v866 = vld [vmem:[%s142 + $0x660] sm:$0xff]
      %v867 = vld [vmem:[%s142 + $0x668] sm:$0xff]
      %v868 = vld [vmem:[%s142 + $0x670] sm:$0xff]
      %v869 = vld [vmem:[%s142 + $0x678] sm:$0xff]
      %v870 = vld [vmem:[%s142 + $0x680] sm:$0xff]
      %v871 = vld [vmem:[%s142 + $0x688] sm:$0xff]
      %v872 = vld [vmem:[%s142 + $0x690] sm:$0xff]
      %v873 = vld [vmem:[%s142 + $0x698] sm:$0xff]
      %v874 = vld [vmem:[%s142 + $0x6a0] sm:$0xff]
      %v875 = vld [vmem:[%s142 + $0x6a8] sm:$0xff]
      %v876 = vld [vmem:[%s142 + $0x6b0] sm:$0xff]
      %v877 = vld [vmem:[%s142 + $0x6b8] sm:$0xff]
      %v878 = vld [vmem:[%s142 + $0x6c0] sm:$0xff]
      %v879 = vld [vmem:[%s142 + $0x6c8] sm:$0xff]
      %v880 = vld [vmem:[%s142 + $0x6d0] sm:$0xff]
      %v881 = vld [vmem:[%s142 + $0x6d8] sm:$0xff]
      %v882 = vld [vmem:[%s142 + $0x6e0] sm:$0xff]
      %v883 = vld [vmem:[%s142 + $0x6e8] sm:$0xff]
      %v884 = vld [vmem:[%s142 + $0x6f0] sm:$0xff]
      %v885 = vld [vmem:[%s142 + $0x6f8] sm:$0xff]
      %v886 = vld [vmem:[%s142 + $0x700] sm:$0xff]
      %v887 = vld [vmem:[%s142 + $0x708] sm:$0xff]
      %v888 = vld [vmem:[%s142 + $0x710] sm:$0xff]
      %v889 = vld [vmem:[%s142 + $0x718] sm:$0xff]
      %v890 = vld [vmem:[%s142 + $0x720] sm:$0xff]
      %v891 = vld [vmem:[%s142 + $0x728] sm:$0xff]
      %v892 = vld [vmem:[%s142 + $0x730] sm:$0xff]
      %v893 = vld [vmem:[%s142 + $0x738] sm:$0xff]
      %v894 = vld [vmem:[%s142 + $0x740] sm:$0xff]
      %v895 = vld [vmem:[%s142 + $0x748] sm:$0xff]
      %v896 = vld [vmem:[%s142 + $0x750] sm:$0xff]
      %v897 = vld [vmem:[%s142 + $0x758] sm:$0xff]
      %v898 = vld [vmem:[%s142 + $0x760] sm:$0xff]
      %v899 = vld [vmem:[%s142 + $0x768] sm:$0xff]
      %v900 = vld [vmem:[%s142 + $0x770] sm:$0xff]
      %v901 = vld [vmem:[%s142 + $0x778] sm:$0xff]
      %v902 = vld [vmem:[%s142 + $0x780] sm:$0xff]
      %v903 = vld [vmem:[%s142 + $0x788] sm:$0xff]
      %v904 = vld [vmem:[%s142 + $0x790] sm:$0xff]
      %v905 = vld [vmem:[%s142 + $0x798] sm:$0xff]
      %v906 = vld [vmem:[%s142 + $0x7a0] sm:$0xff]
      %v907 = vld [vmem:[%s142 + $0x7a8] sm:$0xff]
      %v908 = vld [vmem:[%s142 + $0x7b0] sm:$0xff]
      %v909 = vld [vmem:[%s142 + $0x7b8] sm:$0xff]
      %v910 = vld [vmem:[%s142 + $0x7c0] sm:$0xff]
      %v911 = vld [vmem:[%s142 + $0x7c8] sm:$0xff]
      %v912 = vld [vmem:[%s142 + $0x7d0] sm:$0xff]
      %v913 = vld [vmem:[%s142 + $0x7d8] sm:$0xff]
      %v914 = vld [vmem:[%s142 + $0x7e0] sm:$0xff]
      %v915 = vld [vmem:[%s142 + $0x7e8] sm:$0xff]
      %v916 = vld [vmem:[%s142 + $0x7f0] sm:$0xff]
      %v917 = vld [vmem:[%s142 + $0x7f8] sm:$0xff]
      %918 = vmatpush.msra.mxu0 %v421
      %919 = vmatpush.msra.mxu0 %v420
      %920 = vmatpush.msra.mxu0 %v419
      %921 = vmatpush.msra.mxu0 %v418
      %922 = vmatpush.msra.mxu0 %v417
      %923 = vmatpush.msra.mxu0 %v416
      %924 = vmatpush.msra.mxu0 %v415
      %925 = vmatpush.msra.mxu0 %v414
      %926 = vmatpush.msra.mxu0 %v413
      %927 = vmatpush.msra.mxu0 %v412
      %928 = vmatpush.msra.mxu0 %v411
      %929 = vmatpush.msra.mxu0 %v410
      %930 = vmatpush.msra.mxu0 %v409
      %931 = vmatpush.msra.mxu0 %v408
      %932 = vmatpush.msra.mxu0 %v407
      %933 = vmatpush.msra.mxu0 %v406
      %934 = vmatmul.f32.gmra.mxu0 %v662
      %v935 = vpop.f32.mrf.mxu0
      %v936 = vadd.f32 0.0, %v935
      %937 = vmatmul.f32.gmra.mxu0 %v678
      %v938 = vpop.f32.mrf.mxu0
      %v939 = vadd.f32 0.0, %v938
      %940 = vmatmul.f32.gmra.mxu0 %v694
      %v941 = vpop.f32.mrf.mxu0
      %v942 = vadd.f32 0.0, %v941
      %943 = vmatmul.f32.gmra.mxu0 %v710
      %v944 = vpop.f32.mrf.mxu0
      %v945 = vadd.f32 0.0, %v944
      %946 = vmatmul.f32.gmra.mxu0 %v726
      %v947 = vpop.f32.mrf.mxu0
      %v948 = vadd.f32 0.0, %v947
      %949 = vmatmul.f32.gmra.mxu0 %v742
      %v950 = vpop.f32.mrf.mxu0
      %v951 = vadd.f32 0.0, %v950
      %952 = vmatmul.f32.gmra.mxu0 %v758
      %v953 = vpop.f32.mrf.mxu0
      %v954 = vadd.f32 0.0, %v953
      %955 = vmatmul.f32.gmra.mxu0 %v774
      %v956 = vpop.f32.mrf.mxu0
      %v957 = vadd.f32 0.0, %v956
      %958 = vmatmul.f32.gmra.mxu0 %v790
      %v959 = vpop.f32.mrf.mxu0
      %v960 = vadd.f32 0.0, %v959
      %961 = vmatmul.f32.gmra.mxu0 %v806
      %v962 = vpop.f32.mrf.mxu0
      %v963 = vadd.f32 0.0, %v962
      %964 = vmatmul.f32.gmra.mxu0 %v822
      %v965 = vpop.f32.mrf.mxu0
      %v966 = vadd.f32 0.0, %v965
      %967 = vmatmul.f32.gmra.mxu0 %v838
      %v968 = vpop.f32.mrf.mxu0
      %v969 = vadd.f32 0.0, %v968
      %970 = vmatmul.f32.gmra.mxu0 %v854
      %v971 = vpop.f32.mrf.mxu0
      %v972 = vadd.f32 0.0, %v971
      %973 = vmatmul.f32.gmra.mxu0 %v870
      %v974 = vpop.f32.mrf.mxu0
      %v975 = vadd.f32 0.0, %v974
      %976 = vmatmul.f32.gmra.mxu0 %v886
      %v977 = vpop.f32.mrf.mxu0
      %v978 = vadd.f32 0.0, %v977
      %979 = vmatmul.f32.gmra.mxu0 %v902
      %v980 = vpop.f32.mrf.mxu0
      %v981 = vadd.f32 0.0, %v980
      %982 = vdwg.mxu0
      %983 = vmatpush.msra.mxu0 %v437
      %984 = vmatpush.msra.mxu0 %v436
      %985 = vmatpush.msra.mxu0 %v435
      %986 = vmatpush.msra.mxu0 %v434
      %987 = vmatpush.msra.mxu0 %v433
      %988 = vmatpush.msra.mxu0 %v432
      %989 = vmatpush.msra.mxu0 %v431
      %990 = vmatpush.msra.mxu0 %v430
      %991 = vmatpush.msra.mxu0 %v429
      %992 = vmatpush.msra.mxu0 %v428
      %993 = vmatpush.msra.mxu0 %v427
      %994 = vmatpush.msra.mxu0 %v426
      %995 = vmatpush.msra.mxu0 %v425
      %996 = vmatpush.msra.mxu0 %v424
      %997 = vmatpush.msra.mxu0 %v423
      %998 = vmatpush.msra.mxu0 %v422
      %999 = vmatmul.f32.gmra.mxu0 %v663
      %v1000 = vpop.f32.mrf.mxu0
      %v1001 = vadd.f32 %v936, %v1000
      %1002 = vmatmul.f32.gmra.mxu0 %v679
      %v1003 = vpop.f32.mrf.mxu0
      %v1004 = vadd.f32 %v939, %v1003
      %1005 = vmatmul.f32.gmra.mxu0 %v695
      %v1006 = vpop.f32.mrf.mxu0
      %v1007 = vadd.f32 %v942, %v1006
      %1008 = vmatmul.f32.gmra.mxu0 %v711
      %v1009 = vpop.f32.mrf.mxu0
      %v1010 = vadd.f32 %v945, %v1009
      %1011 = vmatmul.f32.gmra.mxu0 %v727
      %v1012 = vpop.f32.mrf.mxu0
      %v1013 = vadd.f32 %v948, %v1012
      %1014 = vmatmul.f32.gmra.mxu0 %v743
      %v1015 = vpop.f32.mrf.mxu0
      %v1016 = vadd.f32 %v951, %v1015
      %1017 = vmatmul.f32.gmra.mxu0 %v759
      %v1018 = vpop.f32.mrf.mxu0
      %v1019 = vadd.f32 %v954, %v1018
      %1020 = vmatmul.f32.gmra.mxu0 %v775
      %v1021 = vpop.f32.mrf.mxu0
      %v1022 = vadd.f32 %v957, %v1021
      %1023 = vmatmul.f32.gmra.mxu0 %v791
      %v1024 = vpop.f32.mrf.mxu0
      %v1025 = vadd.f32 %v960, %v1024
      %1026 = vmatmul.f32.gmra.mxu0 %v807
      %v1027 = vpop.f32.mrf.mxu0
      %v1028 = vadd.f32 %v963, %v1027
      %1029 = vmatmul.f32.gmra.mxu0 %v823
      %v1030 = vpop.f32.mrf.mxu0
      %v1031 = vadd.f32 %v966, %v1030
      %1032 = vmatmul.f32.gmra.mxu0 %v839
      %v1033 = vpop.f32.mrf.mxu0
      %v1034 = vadd.f32 %v969, %v1033
      %1035 = vmatmul.f32.gmra.mxu0 %v855
      %v1036 = vpop.f32.mrf.mxu0
      %v1037 = vadd.f32 %v972, %v1036
      %1038 = vmatmul.f32.gmra.mxu0 %v871
      %v1039 = vpop.f32.mrf.mxu0
      %v1040 = vadd.f32 %v975, %v1039
      %1041 = vmatmul.f32.gmra.mxu0 %v887
      %v1042 = vpop.f32.mrf.mxu0
      %v1043 = vadd.f32 %v978, %v1042
      %1044 = vmatmul.f32.gmra.mxu0 %v903
      %v1045 = vpop.f32.mrf.mxu0
      %v1046 = vadd.f32 %v981, %v1045
      %1047 = vdwg.mxu0
      %1048 = vmatpush.msra.mxu0 %v453
      %1049 = vmatpush.msra.mxu0 %v452
      %1050 = vmatpush.msra.mxu0 %v451
      %1051 = vmatpush.msra.mxu0 %v450
      %1052 = vmatpush.msra.mxu0 %v449
      %1053 = vmatpush.msra.mxu0 %v448
      %1054 = vmatpush.msra.mxu0 %v447
      %1055 = vmatpush.msra.mxu0 %v446
      %1056 = vmatpush.msra.mxu0 %v445
      %1057 = vmatpush.msra.mxu0 %v444
      %1058 = vmatpush.msra.mxu0 %v443
      %1059 = vmatpush.msra.mxu0 %v442
      %1060 = vmatpush.msra.mxu0 %v441
      %1061 = vmatpush.msra.mxu0 %v440
      %1062 = vmatpush.msra.mxu0 %v439
      %1063 = vmatpush.msra.mxu0 %v438
      %1064 = vmatmul.f32.gmra.mxu0 %v664
      %v1065 = vpop.f32.mrf.mxu0
      %v1066 = vadd.f32 %v1001, %v1065
      %1067 = vmatmul.f32.gmra.mxu0 %v680
      %v1068 = vpop.f32.mrf.mxu0
      %v1069 = vadd.f32 %v1004, %v1068
      %1070 = vmatmul.f32.gmra.mxu0 %v696
      %v1071 = vpop.f32.mrf.mxu0
      %v1072 = vadd.f32 %v1007, %v1071
      %1073 = vmatmul.f32.gmra.mxu0 %v712
      %v1074 = vpop.f32.mrf.mxu0
      %v1075 = vadd.f32 %v1010, %v1074
      %1076 = vmatmul.f32.gmra.mxu0 %v728
      %v1077 = vpop.f32.mrf.mxu0
      %v1078 = vadd.f32 %v1013, %v1077
      %1079 = vmatmul.f32.gmra.mxu0 %v744
      %v1080 = vpop.f32.mrf.mxu0
      %v1081 = vadd.f32 %v1016, %v1080
      %1082 = vmatmul.f32.gmra.mxu0 %v760
      %v1083 = vpop.f32.mrf.mxu0
      %v1084 = vadd.f32 %v1019, %v1083
      %1085 = vmatmul.f32.gmra.mxu0 %v776
      %v1086 = vpop.f32.mrf.mxu0
      %v1087 = vadd.f32 %v1022, %v1086
      %1088 = vmatmul.f32.gmra.mxu0 %v792
      %v1089 = vpop.f32.mrf.mxu0
      %v1090 = vadd.f32 %v1025, %v1089
      %1091 = vmatmul.f32.gmra.mxu0 %v808
      %v1092 = vpop.f32.mrf.mxu0
      %v1093 = vadd.f32 %v1028, %v1092
      %1094 = vmatmul.f32.gmra.mxu0 %v824
      %v1095 = vpop.f32.mrf.mxu0
      %v1096 = vadd.f32 %v1031, %v1095
      %1097 = vmatmul.f32.gmra.mxu0 %v840
      %v1098 = vpop.f32.mrf.mxu0
      %v1099 = vadd.f32 %v1034, %v1098
      %1100 = vmatmul.f32.gmra.mxu0 %v856
      %v1101 = vpop.f32.mrf.mxu0
      %v1102 = vadd.f32 %v1037, %v1101
      %1103 = vmatmul.f32.gmra.mxu0 %v872
      %v1104 = vpop.f32.mrf.mxu0
      %v1105 = vadd.f32 %v1040, %v1104
      %1106 = vmatmul.f32.gmra.mxu0 %v888
      %v1107 = vpop.f32.mrf.mxu0
      %v1108 = vadd.f32 %v1043, %v1107
      %1109 = vmatmul.f32.gmra.mxu0 %v904
      %v1110 = vpop.f32.mrf.mxu0
      %v1111 = vadd.f32 %v1046, %v1110
      %1112 = vdwg.mxu0
      %1113 = vmatpush.msra.mxu0 %v469
      %1114 = vmatpush.msra.mxu0 %v468
      %1115 = vmatpush.msra.mxu0 %v467
      %1116 = vmatpush.msra.mxu0 %v466
      %1117 = vmatpush.msra.mxu0 %v465
      %1118 = vmatpush.msra.mxu0 %v464
      %1119 = vmatpush.msra.mxu0 %v463
      %1120 = vmatpush.msra.mxu0 %v462
      %1121 = vmatpush.msra.mxu0 %v461
      %1122 = vmatpush.msra.mxu0 %v460
      %1123 = vmatpush.msra.mxu0 %v459
      %1124 = vmatpush.msra.mxu0 %v458
      %1125 = vmatpush.msra.mxu0 %v457
      %1126 = vmatpush.msra.mxu0 %v456
      %1127 = vmatpush.msra.mxu0 %v455
      %1128 = vmatpush.msra.mxu0 %v454
      %1129 = vmatmul.f32.gmra.mxu0 %v665
      %v1130 = vpop.f32.mrf.mxu0
      %v1131 = vadd.f32 %v1066, %v1130
      %1132 = vmatmul.f32.gmra.mxu0 %v681
      %v1133 = vpop.f32.mrf.mxu0
      %v1134 = vadd.f32 %v1069, %v1133
      %1135 = vmatmul.f32.gmra.mxu0 %v697
      %v1136 = vpop.f32.mrf.mxu0
      %v1137 = vadd.f32 %v1072, %v1136
      %1138 = vmatmul.f32.gmra.mxu0 %v713
      %v1139 = vpop.f32.mrf.mxu0
      %v1140 = vadd.f32 %v1075, %v1139
      %1141 = vmatmul.f32.gmra.mxu0 %v729
      %v1142 = vpop.f32.mrf.mxu0
      %v1143 = vadd.f32 %v1078, %v1142
      %1144 = vmatmul.f32.gmra.mxu0 %v745
      %v1145 = vpop.f32.mrf.mxu0
      %v1146 = vadd.f32 %v1081, %v1145
      %1147 = vmatmul.f32.gmra.mxu0 %v761
      %v1148 = vpop.f32.mrf.mxu0
      %v1149 = vadd.f32 %v1084, %v1148
      %1150 = vmatmul.f32.gmra.mxu0 %v777
      %v1151 = vpop.f32.mrf.mxu0
      %v1152 = vadd.f32 %v1087, %v1151
      %1153 = vmatmul.f32.gmra.mxu0 %v793
      %v1154 = vpop.f32.mrf.mxu0
      %v1155 = vadd.f32 %v1090, %v1154
      %1156 = vmatmul.f32.gmra.mxu0 %v809
      %v1157 = vpop.f32.mrf.mxu0
      %v1158 = vadd.f32 %v1093, %v1157
      %1159 = vmatmul.f32.gmra.mxu0 %v825
      %v1160 = vpop.f32.mrf.mxu0
      %v1161 = vadd.f32 %v1096, %v1160
      %1162 = vmatmul.f32.gmra.mxu0 %v841
      %v1163 = vpop.f32.mrf.mxu0
      %v1164 = vadd.f32 %v1099, %v1163
      %1165 = vmatmul.f32.gmra.mxu0 %v857
      %v1166 = vpop.f32.mrf.mxu0
      %v1167 = vadd.f32 %v1102, %v1166
      %1168 = vmatmul.f32.gmra.mxu0 %v873
      %v1169 = vpop.f32.mrf.mxu0
      %v1170 = vadd.f32 %v1105, %v1169
      %1171 = vmatmul.f32.gmra.mxu0 %v889
      %v1172 = vpop.f32.mrf.mxu0
      %v1173 = vadd.f32 %v1108, %v1172
      %1174 = vmatmul.f32.gmra.mxu0 %v905
      %v1175 = vpop.f32.mrf.mxu0
      %v1176 = vadd.f32 %v1111, %v1175
      %1177 = vdwg.mxu0
      %1178 = vmatpush.msra.mxu0 %v485
      %1179 = vmatpush.msra.mxu0 %v484
      %1180 = vmatpush.msra.mxu0 %v483
      %1181 = vmatpush.msra.mxu0 %v482
      %1182 = vmatpush.msra.mxu0 %v481
      %1183 = vmatpush.msra.mxu0 %v480
      %1184 = vmatpush.msra.mxu0 %v479
      %1185 = vmatpush.msra.mxu0 %v478
      %1186 = vmatpush.msra.mxu0 %v477
      %1187 = vmatpush.msra.mxu0 %v476
      %1188 = vmatpush.msra.mxu0 %v475
      %1189 = vmatpush.msra.mxu0 %v474
      %1190 = vmatpush.msra.mxu0 %v473
      %1191 = vmatpush.msra.mxu0 %v472
      %1192 = vmatpush.msra.mxu0 %v471
      %1193 = vmatpush.msra.mxu0 %v470
      %1194 = vmatmul.f32.gmra.mxu0 %v666
      %v1195 = vpop.f32.mrf.mxu0
      %v1196 = vadd.f32 %v1131, %v1195
      %1197 = vmatmul.f32.gmra.mxu0 %v682
      %v1198 = vpop.f32.mrf.mxu0
      %v1199 = vadd.f32 %v1134, %v1198
      %1200 = vmatmul.f32.gmra.mxu0 %v698
      %v1201 = vpop.f32.mrf.mxu0
      %v1202 = vadd.f32 %v1137, %v1201
      %1203 = vmatmul.f32.gmra.mxu0 %v714
      %v1204 = vpop.f32.mrf.mxu0
      %v1205 = vadd.f32 %v1140, %v1204
      %1206 = vmatmul.f32.gmra.mxu0 %v730
      %v1207 = vpop.f32.mrf.mxu0
      %v1208 = vadd.f32 %v1143, %v1207
      %1209 = vmatmul.f32.gmra.mxu0 %v746
      %v1210 = vpop.f32.mrf.mxu0
      %v1211 = vadd.f32 %v1146, %v1210
      %1212 = vmatmul.f32.gmra.mxu0 %v762
      %v1213 = vpop.f32.mrf.mxu0
      %v1214 = vadd.f32 %v1149, %v1213
      %1215 = vmatmul.f32.gmra.mxu0 %v778
      %v1216 = vpop.f32.mrf.mxu0
      %v1217 = vadd.f32 %v1152, %v1216
      %1218 = vmatmul.f32.gmra.mxu0 %v794
      %v1219 = vpop.f32.mrf.mxu0
      %v1220 = vadd.f32 %v1155, %v1219
      %1221 = vmatmul.f32.gmra.mxu0 %v810
      %v1222 = vpop.f32.mrf.mxu0
      %v1223 = vadd.f32 %v1158, %v1222
      %1224 = vmatmul.f32.gmra.mxu0 %v826
      %v1225 = vpop.f32.mrf.mxu0
      %v1226 = vadd.f32 %v1161, %v1225
      %1227 = vmatmul.f32.gmra.mxu0 %v842
      %v1228 = vpop.f32.mrf.mxu0
      %v1229 = vadd.f32 %v1164, %v1228
      %1230 = vmatmul.f32.gmra.mxu0 %v858
      %v1231 = vpop.f32.mrf.mxu0
      %v1232 = vadd.f32 %v1167, %v1231
      %1233 = vmatmul.f32.gmra.mxu0 %v874
      %v1234 = vpop.f32.mrf.mxu0
      %v1235 = vadd.f32 %v1170, %v1234
      %1236 = vmatmul.f32.gmra.mxu0 %v890
      %v1237 = vpop.f32.mrf.mxu0
      %v1238 = vadd.f32 %v1173, %v1237
      %1239 = vmatmul.f32.gmra.mxu0 %v906
      %v1240 = vpop.f32.mrf.mxu0
      %v1241 = vadd.f32 %v1176, %v1240
      %1242 = vdwg.mxu0
      %1243 = vmatpush.msra.mxu0 %v501
      %1244 = vmatpush.msra.mxu0 %v500
      %1245 = vmatpush.msra.mxu0 %v499
      %1246 = vmatpush.msra.mxu0 %v498
      %1247 = vmatpush.msra.mxu0 %v497
      %1248 = vmatpush.msra.mxu0 %v496
      %1249 = vmatpush.msra.mxu0 %v495
      %1250 = vmatpush.msra.mxu0 %v494
      %1251 = vmatpush.msra.mxu0 %v493
      %1252 = vmatpush.msra.mxu0 %v492
      %1253 = vmatpush.msra.mxu0 %v491
      %1254 = vmatpush.msra.mxu0 %v490
      %1255 = vmatpush.msra.mxu0 %v489
      %1256 = vmatpush.msra.mxu0 %v488
      %1257 = vmatpush.msra.mxu0 %v487
      %1258 = vmatpush.msra.mxu0 %v486
      %1259 = vmatmul.f32.gmra.mxu0 %v667
      %v1260 = vpop.f32.mrf.mxu0
      %v1261 = vadd.f32 %v1196, %v1260
      %1262 = vmatmul.f32.gmra.mxu0 %v683
      %v1263 = vpop.f32.mrf.mxu0
      %v1264 = vadd.f32 %v1199, %v1263
      %1265 = vmatmul.f32.gmra.mxu0 %v699
      %v1266 = vpop.f32.mrf.mxu0
      %v1267 = vadd.f32 %v1202, %v1266
      %1268 = vmatmul.f32.gmra.mxu0 %v715
      %v1269 = vpop.f32.mrf.mxu0
      %v1270 = vadd.f32 %v1205, %v1269
      %1271 = vmatmul.f32.gmra.mxu0 %v731
      %v1272 = vpop.f32.mrf.mxu0
      %v1273 = vadd.f32 %v1208, %v1272
      %1274 = vmatmul.f32.gmra.mxu0 %v747
      %v1275 = vpop.f32.mrf.mxu0
      %v1276 = vadd.f32 %v1211, %v1275
      %1277 = vmatmul.f32.gmra.mxu0 %v763
      %v1278 = vpop.f32.mrf.mxu0
      %v1279 = vadd.f32 %v1214, %v1278
      %1280 = vmatmul.f32.gmra.mxu0 %v779
      %v1281 = vpop.f32.mrf.mxu0
      %v1282 = vadd.f32 %v1217, %v1281
      %1283 = vmatmul.f32.gmra.mxu0 %v795
      %v1284 = vpop.f32.mrf.mxu0
      %v1285 = vadd.f32 %v1220, %v1284
      %1286 = vmatmul.f32.gmra.mxu0 %v811
      %v1287 = vpop.f32.mrf.mxu0
      %v1288 = vadd.f32 %v1223, %v1287
      %1289 = vmatmul.f32.gmra.mxu0 %v827
      %v1290 = vpop.f32.mrf.mxu0
      %v1291 = vadd.f32 %v1226, %v1290
      %1292 = vmatmul.f32.gmra.mxu0 %v843
      %v1293 = vpop.f32.mrf.mxu0
      %v1294 = vadd.f32 %v1229, %v1293
      %1295 = vmatmul.f32.gmra.mxu0 %v859
      %v1296 = vpop.f32.mrf.mxu0
      %v1297 = vadd.f32 %v1232, %v1296
      %1298 = vmatmul.f32.gmra.mxu0 %v875
      %v1299 = vpop.f32.mrf.mxu0
      %v1300 = vadd.f32 %v1235, %v1299
      %1301 = vmatmul.f32.gmra.mxu0 %v891
      %v1302 = vpop.f32.mrf.mxu0
      %v1303 = vadd.f32 %v1238, %v1302
      %1304 = vmatmul.f32.gmra.mxu0 %v907
      %v1305 = vpop.f32.mrf.mxu0
      %v1306 = vadd.f32 %v1241, %v1305
      %1307 = vdwg.mxu0
      %1308 = vmatpush.msra.mxu0 %v517
      %1309 = vmatpush.msra.mxu0 %v516
      %1310 = vmatpush.msra.mxu0 %v515
      %1311 = vmatpush.msra.mxu0 %v514
      %1312 = vmatpush.msra.mxu0 %v513
      %1313 = vmatpush.msra.mxu0 %v512
      %1314 = vmatpush.msra.mxu0 %v511
      %1315 = vmatpush.msra.mxu0 %v510
      %1316 = vmatpush.msra.mxu0 %v509
      %1317 = vmatpush.msra.mxu0 %v508
      %1318 = vmatpush.msra.mxu0 %v507
      %1319 = vmatpush.msra.mxu0 %v506
      %1320 = vmatpush.msra.mxu0 %v505
      %1321 = vmatpush.msra.mxu0 %v504
      %1322 = vmatpush.msra.mxu0 %v503
      %1323 = vmatpush.msra.mxu0 %v502
      %1324 = vmatmul.f32.gmra.mxu0 %v668
      %v1325 = vpop.f32.mrf.mxu0
      %v1326 = vadd.f32 %v1261, %v1325
      %1327 = vmatmul.f32.gmra.mxu0 %v684
      %v1328 = vpop.f32.mrf.mxu0
      %v1329 = vadd.f32 %v1264, %v1328
      %1330 = vmatmul.f32.gmra.mxu0 %v700
      %v1331 = vpop.f32.mrf.mxu0
      %v1332 = vadd.f32 %v1267, %v1331
      %1333 = vmatmul.f32.gmra.mxu0 %v716
      %v1334 = vpop.f32.mrf.mxu0
      %v1335 = vadd.f32 %v1270, %v1334
      %1336 = vmatmul.f32.gmra.mxu0 %v732
      %v1337 = vpop.f32.mrf.mxu0
      %v1338 = vadd.f32 %v1273, %v1337
      %1339 = vmatmul.f32.gmra.mxu0 %v748
      %v1340 = vpop.f32.mrf.mxu0
      %v1341 = vadd.f32 %v1276, %v1340
      %1342 = vmatmul.f32.gmra.mxu0 %v764
      %v1343 = vpop.f32.mrf.mxu0
      %v1344 = vadd.f32 %v1279, %v1343
      %1345 = vmatmul.f32.gmra.mxu0 %v780
      %v1346 = vpop.f32.mrf.mxu0
      %v1347 = vadd.f32 %v1282, %v1346
      %1348 = vmatmul.f32.gmra.mxu0 %v796
      %v1349 = vpop.f32.mrf.mxu0
      %v1350 = vadd.f32 %v1285, %v1349
      %1351 = vmatmul.f32.gmra.mxu0 %v812
      %v1352 = vpop.f32.mrf.mxu0
      %v1353 = vadd.f32 %v1288, %v1352
      %1354 = vmatmul.f32.gmra.mxu0 %v828
      %v1355 = vpop.f32.mrf.mxu0
      %v1356 = vadd.f32 %v1291, %v1355
      %1357 = vmatmul.f32.gmra.mxu0 %v844
      %v1358 = vpop.f32.mrf.mxu0
      %v1359 = vadd.f32 %v1294, %v1358
      %1360 = vmatmul.f32.gmra.mxu0 %v860
      %v1361 = vpop.f32.mrf.mxu0
      %v1362 = vadd.f32 %v1297, %v1361
      %1363 = vmatmul.f32.gmra.mxu0 %v876
      %v1364 = vpop.f32.mrf.mxu0
      %v1365 = vadd.f32 %v1300, %v1364
      %1366 = vmatmul.f32.gmra.mxu0 %v892
      %v1367 = vpop.f32.mrf.mxu0
      %v1368 = vadd.f32 %v1303, %v1367
      %1369 = vmatmul.f32.gmra.mxu0 %v908
      %v1370 = vpop.f32.mrf.mxu0
      %v1371 = vadd.f32 %v1306, %v1370
      %1372 = vdwg.mxu0
      %1373 = vmatpush.msra.mxu0 %v533
      %1374 = vmatpush.msra.mxu0 %v532
      %1375 = vmatpush.msra.mxu0 %v531
      %1376 = vmatpush.msra.mxu0 %v530
      %1377 = vmatpush.msra.mxu0 %v529
      %1378 = vmatpush.msra.mxu0 %v528
      %1379 = vmatpush.msra.mxu0 %v527
      %1380 = vmatpush.msra.mxu0 %v526
      %1381 = vmatpush.msra.mxu0 %v525
      %1382 = vmatpush.msra.mxu0 %v524
      %1383 = vmatpush.msra.mxu0 %v523
      %1384 = vmatpush.msra.mxu0 %v522
      %1385 = vmatpush.msra.mxu0 %v521
      %1386 = vmatpush.msra.mxu0 %v520
      %1387 = vmatpush.msra.mxu0 %v519
      %1388 = vmatpush.msra.mxu0 %v518
      %1389 = vmatmul.f32.gmra.mxu0 %v669
      %v1390 = vpop.f32.mrf.mxu0
      %v1391 = vadd.f32 %v1326, %v1390
      %1392 = vmatmul.f32.gmra.mxu0 %v685
      %v1393 = vpop.f32.mrf.mxu0
      %v1394 = vadd.f32 %v1329, %v1393
      %1395 = vmatmul.f32.gmra.mxu0 %v701
      %v1396 = vpop.f32.mrf.mxu0
      %v1397 = vadd.f32 %v1332, %v1396
      %1398 = vmatmul.f32.gmra.mxu0 %v717
      %v1399 = vpop.f32.mrf.mxu0
      %v1400 = vadd.f32 %v1335, %v1399
      %1401 = vmatmul.f32.gmra.mxu0 %v733
      %v1402 = vpop.f32.mrf.mxu0
      %v1403 = vadd.f32 %v1338, %v1402
      %1404 = vmatmul.f32.gmra.mxu0 %v749
      %v1405 = vpop.f32.mrf.mxu0
      %v1406 = vadd.f32 %v1341, %v1405
      %1407 = vmatmul.f32.gmra.mxu0 %v765
      %v1408 = vpop.f32.mrf.mxu0
      %v1409 = vadd.f32 %v1344, %v1408
      %1410 = vmatmul.f32.gmra.mxu0 %v781
      %v1411 = vpop.f32.mrf.mxu0
      %v1412 = vadd.f32 %v1347, %v1411
      %1413 = vmatmul.f32.gmra.mxu0 %v797
      %v1414 = vpop.f32.mrf.mxu0
      %v1415 = vadd.f32 %v1350, %v1414
      %1416 = vmatmul.f32.gmra.mxu0 %v813
      %v1417 = vpop.f32.mrf.mxu0
      %v1418 = vadd.f32 %v1353, %v1417
      %1419 = vmatmul.f32.gmra.mxu0 %v829
      %v1420 = vpop.f32.mrf.mxu0
      %v1421 = vadd.f32 %v1356, %v1420
      %1422 = vmatmul.f32.gmra.mxu0 %v845
      %v1423 = vpop.f32.mrf.mxu0
      %v1424 = vadd.f32 %v1359, %v1423
      %1425 = vmatmul.f32.gmra.mxu0 %v861
      %v1426 = vpop.f32.mrf.mxu0
      %v1427 = vadd.f32 %v1362, %v1426
      %1428 = vmatmul.f32.gmra.mxu0 %v877
      %v1429 = vpop.f32.mrf.mxu0
      %v1430 = vadd.f32 %v1365, %v1429
      %1431 = vmatmul.f32.gmra.mxu0 %v893
      %v1432 = vpop.f32.mrf.mxu0
      %v1433 = vadd.f32 %v1368, %v1432
      %1434 = vmatmul.f32.gmra.mxu0 %v909
      %v1435 = vpop.f32.mrf.mxu0
      %v1436 = vadd.f32 %v1371, %v1435
      %1437 = vdwg.mxu0
      %1438 = vmatpush.msra.mxu0 %v549
      %1439 = vmatpush.msra.mxu0 %v548
      %1440 = vmatpush.msra.mxu0 %v547
      %1441 = vmatpush.msra.mxu0 %v546
      %1442 = vmatpush.msra.mxu0 %v545
      %1443 = vmatpush.msra.mxu0 %v544
      %1444 = vmatpush.msra.mxu0 %v543
      %1445 = vmatpush.msra.mxu0 %v542
      %1446 = vmatpush.msra.mxu0 %v541
      %1447 = vmatpush.msra.mxu0 %v540
      %1448 = vmatpush.msra.mxu0 %v539
      %1449 = vmatpush.msra.mxu0 %v538
      %1450 = vmatpush.msra.mxu0 %v537
      %1451 = vmatpush.msra.mxu0 %v536
      %1452 = vmatpush.msra.mxu0 %v535
      %1453 = vmatpush.msra.mxu0 %v534
      %1454 = vmatmul.f32.gmra.mxu0 %v670
      %v1455 = vpop.f32.mrf.mxu0
      %v1456 = vadd.f32 %v1391, %v1455
      %1457 = vmatmul.f32.gmra.mxu0 %v686
      %v1458 = vpop.f32.mrf.mxu0
      %v1459 = vadd.f32 %v1394, %v1458
      %1460 = vmatmul.f32.gmra.mxu0 %v702
      %v1461 = vpop.f32.mrf.mxu0
      %v1462 = vadd.f32 %v1397, %v1461
      %1463 = vmatmul.f32.gmra.mxu0 %v718
      %v1464 = vpop.f32.mrf.mxu0
      %v1465 = vadd.f32 %v1400, %v1464
      %1466 = vmatmul.f32.gmra.mxu0 %v734
      %v1467 = vpop.f32.mrf.mxu0
      %v1468 = vadd.f32 %v1403, %v1467
      %1469 = vmatmul.f32.gmra.mxu0 %v750
      %v1470 = vpop.f32.mrf.mxu0
      %v1471 = vadd.f32 %v1406, %v1470
      %1472 = vmatmul.f32.gmra.mxu0 %v766
      %v1473 = vpop.f32.mrf.mxu0
      %v1474 = vadd.f32 %v1409, %v1473
      %1475 = vmatmul.f32.gmra.mxu0 %v782
      %v1476 = vpop.f32.mrf.mxu0
      %v1477 = vadd.f32 %v1412, %v1476
      %1478 = vmatmul.f32.gmra.mxu0 %v798
      %v1479 = vpop.f32.mrf.mxu0
      %v1480 = vadd.f32 %v1415, %v1479
      %1481 = vmatmul.f32.gmra.mxu0 %v814
      %v1482 = vpop.f32.mrf.mxu0
      %v1483 = vadd.f32 %v1418, %v1482
      %1484 = vmatmul.f32.gmra.mxu0 %v830
      %v1485 = vpop.f32.mrf.mxu0
      %v1486 = vadd.f32 %v1421, %v1485
      %1487 = vmatmul.f32.gmra.mxu0 %v846
      %v1488 = vpop.f32.mrf.mxu0
      %v1489 = vadd.f32 %v1424, %v1488
      %1490 = vmatmul.f32.gmra.mxu0 %v862
      %v1491 = vpop.f32.mrf.mxu0
      %v1492 = vadd.f32 %v1427, %v1491
      %1493 = vmatmul.f32.gmra.mxu0 %v878
      %v1494 = vpop.f32.mrf.mxu0
      %v1495 = vadd.f32 %v1430, %v1494
      %1496 = vmatmul.f32.gmra.mxu0 %v894
      %v1497 = vpop.f32.mrf.mxu0
      %v1498 = vadd.f32 %v1433, %v1497
      %1499 = vmatmul.f32.gmra.mxu0 %v910
      %v1500 = vpop.f32.mrf.mxu0
      %v1501 = vadd.f32 %v1436, %v1500
      %1502 = vdwg.mxu0
      %1503 = vmatpush.msra.mxu0 %v565
      %1504 = vmatpush.msra.mxu0 %v564
      %1505 = vmatpush.msra.mxu0 %v563
      %1506 = vmatpush.msra.mxu0 %v562
      %1507 = vmatpush.msra.mxu0 %v561
      %1508 = vmatpush.msra.mxu0 %v560
      %1509 = vmatpush.msra.mxu0 %v559
      %1510 = vmatpush.msra.mxu0 %v558
      %1511 = vmatpush.msra.mxu0 %v557
      %1512 = vmatpush.msra.mxu0 %v556
      %1513 = vmatpush.msra.mxu0 %v555
      %1514 = vmatpush.msra.mxu0 %v554
      %1515 = vmatpush.msra.mxu0 %v553
      %1516 = vmatpush.msra.mxu0 %v552
      %1517 = vmatpush.msra.mxu0 %v551
      %1518 = vmatpush.msra.mxu0 %v550
      %1519 = vmatmul.f32.gmra.mxu0 %v671
      %v1520 = vpop.f32.mrf.mxu0
      %v1521 = vadd.f32 %v1456, %v1520
      %1522 = vmatmul.f32.gmra.mxu0 %v687
      %v1523 = vpop.f32.mrf.mxu0
      %v1524 = vadd.f32 %v1459, %v1523
      %1525 = vmatmul.f32.gmra.mxu0 %v703
      %v1526 = vpop.f32.mrf.mxu0
      %v1527 = vadd.f32 %v1462, %v1526
      %1528 = vmatmul.f32.gmra.mxu0 %v719
      %v1529 = vpop.f32.mrf.mxu0
      %v1530 = vadd.f32 %v1465, %v1529
      %1531 = vmatmul.f32.gmra.mxu0 %v735
      %v1532 = vpop.f32.mrf.mxu0
      %v1533 = vadd.f32 %v1468, %v1532
      %1534 = vmatmul.f32.gmra.mxu0 %v751
      %v1535 = vpop.f32.mrf.mxu0
      %v1536 = vadd.f32 %v1471, %v1535
      %1537 = vmatmul.f32.gmra.mxu0 %v767
      %v1538 = vpop.f32.mrf.mxu0
      %v1539 = vadd.f32 %v1474, %v1538
      %1540 = vmatmul.f32.gmra.mxu0 %v783
      %v1541 = vpop.f32.mrf.mxu0
      %v1542 = vadd.f32 %v1477, %v1541
      %1543 = vmatmul.f32.gmra.mxu0 %v799
      %v1544 = vpop.f32.mrf.mxu0
      %v1545 = vadd.f32 %v1480, %v1544
      %1546 = vmatmul.f32.gmra.mxu0 %v815
      %v1547 = vpop.f32.mrf.mxu0
      %v1548 = vadd.f32 %v1483, %v1547
      %1549 = vmatmul.f32.gmra.mxu0 %v831
      %v1550 = vpop.f32.mrf.mxu0
      %v1551 = vadd.f32 %v1486, %v1550
      %1552 = vmatmul.f32.gmra.mxu0 %v847
      %v1553 = vpop.f32.mrf.mxu0
      %v1554 = vadd.f32 %v1489, %v1553
      %1555 = vmatmul.f32.gmra.mxu0 %v863
      %v1556 = vpop.f32.mrf.mxu0
      %v1557 = vadd.f32 %v1492, %v1556
      %1558 = vmatmul.f32.gmra.mxu0 %v879
      %v1559 = vpop.f32.mrf.mxu0
      %v1560 = vadd.f32 %v1495, %v1559
      %1561 = vmatmul.f32.gmra.mxu0 %v895
      %v1562 = vpop.f32.mrf.mxu0
      %v1563 = vadd.f32 %v1498, %v1562
      %1564 = vmatmul.f32.gmra.mxu0 %v911
      %v1565 = vpop.f32.mrf.mxu0
      %v1566 = vadd.f32 %v1501, %v1565
      %1567 = vdwg.mxu0
      %1568 = vmatpush.msra.mxu0 %v581
      %1569 = vmatpush.msra.mxu0 %v580
      %1570 = vmatpush.msra.mxu0 %v579
      %1571 = vmatpush.msra.mxu0 %v578
      %1572 = vmatpush.msra.mxu0 %v577
      %1573 = vmatpush.msra.mxu0 %v576
      %1574 = vmatpush.msra.mxu0 %v575
      %1575 = vmatpush.msra.mxu0 %v574
      %1576 = vmatpush.msra.mxu0 %v573
      %1577 = vmatpush.msra.mxu0 %v572
      %1578 = vmatpush.msra.mxu0 %v571
      %1579 = vmatpush.msra.mxu0 %v570
      %1580 = vmatpush.msra.mxu0 %v569
      %1581 = vmatpush.msra.mxu0 %v568
      %1582 = vmatpush.msra.mxu0 %v567
      %1583 = vmatpush.msra.mxu0 %v566
      %1584 = vmatmul.f32.gmra.mxu0 %v672
      %v1585 = vpop.f32.mrf.mxu0
      %v1586 = vadd.f32 %v1521, %v1585
      %1587 = vmatmul.f32.gmra.mxu0 %v688
      %v1588 = vpop.f32.mrf.mxu0
      %v1589 = vadd.f32 %v1524, %v1588
      %1590 = vmatmul.f32.gmra.mxu0 %v704
      %v1591 = vpop.f32.mrf.mxu0
      %v1592 = vadd.f32 %v1527, %v1591
      %1593 = vmatmul.f32.gmra.mxu0 %v720
      %v1594 = vpop.f32.mrf.mxu0
      %v1595 = vadd.f32 %v1530, %v1594
      %1596 = vmatmul.f32.gmra.mxu0 %v736
      %v1597 = vpop.f32.mrf.mxu0
      %v1598 = vadd.f32 %v1533, %v1597
      %1599 = vmatmul.f32.gmra.mxu0 %v752
      %v1600 = vpop.f32.mrf.mxu0
      %v1601 = vadd.f32 %v1536, %v1600
      %1602 = vmatmul.f32.gmra.mxu0 %v768
      %v1603 = vpop.f32.mrf.mxu0
      %v1604 = vadd.f32 %v1539, %v1603
      %1605 = vmatmul.f32.gmra.mxu0 %v784
      %v1606 = vpop.f32.mrf.mxu0
      %v1607 = vadd.f32 %v1542, %v1606
      %1608 = vmatmul.f32.gmra.mxu0 %v800
      %v1609 = vpop.f32.mrf.mxu0
      %v1610 = vadd.f32 %v1545, %v1609
      %1611 = vmatmul.f32.gmra.mxu0 %v816
      %v1612 = vpop.f32.mrf.mxu0
      %v1613 = vadd.f32 %v1548, %v1612
      %1614 = vmatmul.f32.gmra.mxu0 %v832
      %v1615 = vpop.f32.mrf.mxu0
      %v1616 = vadd.f32 %v1551, %v1615
      %1617 = vmatmul.f32.gmra.mxu0 %v848
      %v1618 = vpop.f32.mrf.mxu0
      %v1619 = vadd.f32 %v1554, %v1618
      %1620 = vmatmul.f32.gmra.mxu0 %v864
      %v1621 = vpop.f32.mrf.mxu0
      %v1622 = vadd.f32 %v1557, %v1621
      %1623 = vmatmul.f32.gmra.mxu0 %v880
      %v1624 = vpop.f32.mrf.mxu0
      %v1625 = vadd.f32 %v1560, %v1624
      %1626 = vmatmul.f32.gmra.mxu0 %v896
      %v1627 = vpop.f32.mrf.mxu0
      %v1628 = vadd.f32 %v1563, %v1627
      %1629 = vmatmul.f32.gmra.mxu0 %v912
      %v1630 = vpop.f32.mrf.mxu0
      %v1631 = vadd.f32 %v1566, %v1630
      %1632 = vdwg.mxu0
      %1633 = vmatpush.msra.mxu0 %v597
      %1634 = vmatpush.msra.mxu0 %v596
      %1635 = vmatpush.msra.mxu0 %v595
      %1636 = vmatpush.msra.mxu0 %v594
      %1637 = vmatpush.msra.mxu0 %v593
      %1638 = vmatpush.msra.mxu0 %v592
      %1639 = vmatpush.msra.mxu0 %v591
      %1640 = vmatpush.msra.mxu0 %v590
      %1641 = vmatpush.msra.mxu0 %v589
      %1642 = vmatpush.msra.mxu0 %v588
      %1643 = vmatpush.msra.mxu0 %v587
      %1644 = vmatpush.msra.mxu0 %v586
      %1645 = vmatpush.msra.mxu0 %v585
      %1646 = vmatpush.msra.mxu0 %v584
      %1647 = vmatpush.msra.mxu0 %v583
      %1648 = vmatpush.msra.mxu0 %v582
      %1649 = vmatmul.f32.gmra.mxu0 %v673
      %v1650 = vpop.f32.mrf.mxu0
      %v1651 = vadd.f32 %v1586, %v1650
      %1652 = vmatmul.f32.gmra.mxu0 %v689
      %v1653 = vpop.f32.mrf.mxu0
      %v1654 = vadd.f32 %v1589, %v1653
      %1655 = vmatmul.f32.gmra.mxu0 %v705
      %v1656 = vpop.f32.mrf.mxu0
      %v1657 = vadd.f32 %v1592, %v1656
      %1658 = vmatmul.f32.gmra.mxu0 %v721
      %v1659 = vpop.f32.mrf.mxu0
      %v1660 = vadd.f32 %v1595, %v1659
      %1661 = vmatmul.f32.gmra.mxu0 %v737
      %v1662 = vpop.f32.mrf.mxu0
      %v1663 = vadd.f32 %v1598, %v1662
      %1664 = vmatmul.f32.gmra.mxu0 %v753
      %v1665 = vpop.f32.mrf.mxu0
      %v1666 = vadd.f32 %v1601, %v1665
      %1667 = vmatmul.f32.gmra.mxu0 %v769
      %v1668 = vpop.f32.mrf.mxu0
      %v1669 = vadd.f32 %v1604, %v1668
      %1670 = vmatmul.f32.gmra.mxu0 %v785
      %v1671 = vpop.f32.mrf.mxu0
      %v1672 = vadd.f32 %v1607, %v1671
      %1673 = vmatmul.f32.gmra.mxu0 %v801
      %v1674 = vpop.f32.mrf.mxu0
      %v1675 = vadd.f32 %v1610, %v1674
      %1676 = vmatmul.f32.gmra.mxu0 %v817
      %v1677 = vpop.f32.mrf.mxu0
      %v1678 = vadd.f32 %v1613, %v1677
      %1679 = vmatmul.f32.gmra.mxu0 %v833
      %v1680 = vpop.f32.mrf.mxu0
      %v1681 = vadd.f32 %v1616, %v1680
      %1682 = vmatmul.f32.gmra.mxu0 %v849
      %v1683 = vpop.f32.mrf.mxu0
      %v1684 = vadd.f32 %v1619, %v1683
      %1685 = vmatmul.f32.gmra.mxu0 %v865
      %v1686 = vpop.f32.mrf.mxu0
      %v1687 = vadd.f32 %v1622, %v1686
      %1688 = vmatmul.f32.gmra.mxu0 %v881
      %v1689 = vpop.f32.mrf.mxu0
      %v1690 = vadd.f32 %v1625, %v1689
      %1691 = vmatmul.f32.gmra.mxu0 %v897
      %v1692 = vpop.f32.mrf.mxu0
      %v1693 = vadd.f32 %v1628, %v1692
      %1694 = vmatmul.f32.gmra.mxu0 %v913
      %v1695 = vpop.f32.mrf.mxu0
      %v1696 = vadd.f32 %v1631, %v1695
      %1697 = vdwg.mxu0
      %1698 = vmatpush.msra.mxu0 %v613
      %1699 = vmatpush.msra.mxu0 %v612
      %1700 = vmatpush.msra.mxu0 %v611
      %1701 = vmatpush.msra.mxu0 %v610
      %1702 = vmatpush.msra.mxu0 %v609
      %1703 = vmatpush.msra.mxu0 %v608
      %1704 = vmatpush.msra.mxu0 %v607
      %1705 = vmatpush.msra.mxu0 %v606
      %1706 = vmatpush.msra.mxu0 %v605
      %1707 = vmatpush.msra.mxu0 %v604
      %1708 = vmatpush.msra.mxu0 %v603
      %1709 = vmatpush.msra.mxu0 %v602
      %1710 = vmatpush.msra.mxu0 %v601
      %1711 = vmatpush.msra.mxu0 %v600
      %1712 = vmatpush.msra.mxu0 %v599
      %1713 = vmatpush.msra.mxu0 %v598
      %1714 = vmatmul.f32.gmra.mxu0 %v674
      %v1715 = vpop.f32.mrf.mxu0
      %v1716 = vadd.f32 %v1651, %v1715
      %1717 = vmatmul.f32.gmra.mxu0 %v690
      %v1718 = vpop.f32.mrf.mxu0
      %v1719 = vadd.f32 %v1654, %v1718
      %1720 = vmatmul.f32.gmra.mxu0 %v706
      %v1721 = vpop.f32.mrf.mxu0
      %v1722 = vadd.f32 %v1657, %v1721
      %1723 = vmatmul.f32.gmra.mxu0 %v722
      %v1724 = vpop.f32.mrf.mxu0
      %v1725 = vadd.f32 %v1660, %v1724
      %1726 = vmatmul.f32.gmra.mxu0 %v738
      %v1727 = vpop.f32.mrf.mxu0
      %v1728 = vadd.f32 %v1663, %v1727
      %1729 = vmatmul.f32.gmra.mxu0 %v754
      %v1730 = vpop.f32.mrf.mxu0
      %v1731 = vadd.f32 %v1666, %v1730
      %1732 = vmatmul.f32.gmra.mxu0 %v770
      %v1733 = vpop.f32.mrf.mxu0
      %v1734 = vadd.f32 %v1669, %v1733
      %1735 = vmatmul.f32.gmra.mxu0 %v786
      %v1736 = vpop.f32.mrf.mxu0
      %v1737 = vadd.f32 %v1672, %v1736
      %1738 = vmatmul.f32.gmra.mxu0 %v802
      %v1739 = vpop.f32.mrf.mxu0
      %v1740 = vadd.f32 %v1675, %v1739
      %1741 = vmatmul.f32.gmra.mxu0 %v818
      %v1742 = vpop.f32.mrf.mxu0
      %v1743 = vadd.f32 %v1678, %v1742
      %1744 = vmatmul.f32.gmra.mxu0 %v834
      %v1745 = vpop.f32.mrf.mxu0
      %v1746 = vadd.f32 %v1681, %v1745
      %1747 = vmatmul.f32.gmra.mxu0 %v850
      %v1748 = vpop.f32.mrf.mxu0
      %v1749 = vadd.f32 %v1684, %v1748
      %1750 = vmatmul.f32.gmra.mxu0 %v866
      %v1751 = vpop.f32.mrf.mxu0
      %v1752 = vadd.f32 %v1687, %v1751
      %1753 = vmatmul.f32.gmra.mxu0 %v882
      %v1754 = vpop.f32.mrf.mxu0
      %v1755 = vadd.f32 %v1690, %v1754
      %1756 = vmatmul.f32.gmra.mxu0 %v898
      %v1757 = vpop.f32.mrf.mxu0
      %v1758 = vadd.f32 %v1693, %v1757
      %1759 = vmatmul.f32.gmra.mxu0 %v914
      %v1760 = vpop.f32.mrf.mxu0
      %v1761 = vadd.f32 %v1696, %v1760
      %1762 = vdwg.mxu0
      %1763 = vmatpush.msra.mxu0 %v629
      %1764 = vmatpush.msra.mxu0 %v628
      %1765 = vmatpush.msra.mxu0 %v627
      %1766 = vmatpush.msra.mxu0 %v626
      %1767 = vmatpush.msra.mxu0 %v625
      %1768 = vmatpush.msra.mxu0 %v624
      %1769 = vmatpush.msra.mxu0 %v623
      %1770 = vmatpush.msra.mxu0 %v622
      %1771 = vmatpush.msra.mxu0 %v621
      %1772 = vmatpush.msra.mxu0 %v620
      %1773 = vmatpush.msra.mxu0 %v619
      %1774 = vmatpush.msra.mxu0 %v618
      %1775 = vmatpush.msra.mxu0 %v617
      %1776 = vmatpush.msra.mxu0 %v616
      %1777 = vmatpush.msra.mxu0 %v615
      %1778 = vmatpush.msra.mxu0 %v614
      %1779 = vmatmul.f32.gmra.mxu0 %v675
      %v1780 = vpop.f32.mrf.mxu0
      %v1781 = vadd.f32 %v1716, %v1780
      %1782 = vmatmul.f32.gmra.mxu0 %v691
      %v1783 = vpop.f32.mrf.mxu0
      %v1784 = vadd.f32 %v1719, %v1783
      %1785 = vmatmul.f32.gmra.mxu0 %v707
      %v1786 = vpop.f32.mrf.mxu0
      %v1787 = vadd.f32 %v1722, %v1786
      %1788 = vmatmul.f32.gmra.mxu0 %v723
      %v1789 = vpop.f32.mrf.mxu0
      %v1790 = vadd.f32 %v1725, %v1789
      %1791 = vmatmul.f32.gmra.mxu0 %v739
      %v1792 = vpop.f32.mrf.mxu0
      %v1793 = vadd.f32 %v1728, %v1792
      %1794 = vmatmul.f32.gmra.mxu0 %v755
      %v1795 = vpop.f32.mrf.mxu0
      %v1796 = vadd.f32 %v1731, %v1795
      %1797 = vmatmul.f32.gmra.mxu0 %v771
      %v1798 = vpop.f32.mrf.mxu0
      %v1799 = vadd.f32 %v1734, %v1798
      %1800 = vmatmul.f32.gmra.mxu0 %v787
      %v1801 = vpop.f32.mrf.mxu0
      %v1802 = vadd.f32 %v1737, %v1801
      %1803 = vmatmul.f32.gmra.mxu0 %v803
      %v1804 = vpop.f32.mrf.mxu0
      %v1805 = vadd.f32 %v1740, %v1804
      %1806 = vmatmul.f32.gmra.mxu0 %v819
      %v1807 = vpop.f32.mrf.mxu0
      %v1808 = vadd.f32 %v1743, %v1807
      %1809 = vmatmul.f32.gmra.mxu0 %v835
      %v1810 = vpop.f32.mrf.mxu0
      %v1811 = vadd.f32 %v1746, %v1810
      %1812 = vmatmul.f32.gmra.mxu0 %v851
      %v1813 = vpop.f32.mrf.mxu0
      %v1814 = vadd.f32 %v1749, %v1813
      %1815 = vmatmul.f32.gmra.mxu0 %v867
      %v1816 = vpop.f32.mrf.mxu0
      %v1817 = vadd.f32 %v1752, %v1816
      %1818 = vmatmul.f32.gmra.mxu0 %v883
      %v1819 = vpop.f32.mrf.mxu0
      %v1820 = vadd.f32 %v1755, %v1819
      %1821 = vmatmul.f32.gmra.mxu0 %v899
      %v1822 = vpop.f32.mrf.mxu0
      %v1823 = vadd.f32 %v1758, %v1822
      %1824 = vmatmul.f32.gmra.mxu0 %v915
      %v1825 = vpop.f32.mrf.mxu0
      %v1826 = vadd.f32 %v1761, %v1825
      %1827 = vdwg.mxu0
      %1828 = vmatpush.msra.mxu0 %v645
      %1829 = vmatpush.msra.mxu0 %v644
      %1830 = vmatpush.msra.mxu0 %v643
      %1831 = vmatpush.msra.mxu0 %v642
      %1832 = vmatpush.msra.mxu0 %v641
      %1833 = vmatpush.msra.mxu0 %v640
      %1834 = vmatpush.msra.mxu0 %v639
      %1835 = vmatpush.msra.mxu0 %v638
      %1836 = vmatpush.msra.mxu0 %v637
      %1837 = vmatpush.msra.mxu0 %v636
      %1838 = vmatpush.msra.mxu0 %v635
      %1839 = vmatpush.msra.mxu0 %v634
      %1840 = vmatpush.msra.mxu0 %v633
      %1841 = vmatpush.msra.mxu0 %v632
      %1842 = vmatpush.msra.mxu0 %v631
      %1843 = vmatpush.msra.mxu0 %v630
      %1844 = vmatmul.f32.gmra.mxu0 %v676
      %v1845 = vpop.f32.mrf.mxu0
      %v1846 = vadd.f32 %v1781, %v1845
      %1847 = vmatmul.f32.gmra.mxu0 %v692
      %v1848 = vpop.f32.mrf.mxu0
      %v1849 = vadd.f32 %v1784, %v1848
      %1850 = vmatmul.f32.gmra.mxu0 %v708
      %v1851 = vpop.f32.mrf.mxu0
      %v1852 = vadd.f32 %v1787, %v1851
      %1853 = vmatmul.f32.gmra.mxu0 %v724
      %v1854 = vpop.f32.mrf.mxu0
      %v1855 = vadd.f32 %v1790, %v1854
      %1856 = vmatmul.f32.gmra.mxu0 %v740
      %v1857 = vpop.f32.mrf.mxu0
      %v1858 = vadd.f32 %v1793, %v1857
      %1859 = vmatmul.f32.gmra.mxu0 %v756
      %v1860 = vpop.f32.mrf.mxu0
      %v1861 = vadd.f32 %v1796, %v1860
      %1862 = vmatmul.f32.gmra.mxu0 %v772
      %v1863 = vpop.f32.mrf.mxu0
      %v1864 = vadd.f32 %v1799, %v1863
      %1865 = vmatmul.f32.gmra.mxu0 %v788
      %v1866 = vpop.f32.mrf.mxu0
      %v1867 = vadd.f32 %v1802, %v1866
      %1868 = vmatmul.f32.gmra.mxu0 %v804
      %v1869 = vpop.f32.mrf.mxu0
      %v1870 = vadd.f32 %v1805, %v1869
      %1871 = vmatmul.f32.gmra.mxu0 %v820
      %v1872 = vpop.f32.mrf.mxu0
      %v1873 = vadd.f32 %v1808, %v1872
      %1874 = vmatmul.f32.gmra.mxu0 %v836
      %v1875 = vpop.f32.mrf.mxu0
      %v1876 = vadd.f32 %v1811, %v1875
      %1877 = vmatmul.f32.gmra.mxu0 %v852
      %v1878 = vpop.f32.mrf.mxu0
      %v1879 = vadd.f32 %v1814, %v1878
      %1880 = vmatmul.f32.gmra.mxu0 %v868
      %v1881 = vpop.f32.mrf.mxu0
      %v1882 = vadd.f32 %v1817, %v1881
      %1883 = vmatmul.f32.gmra.mxu0 %v884
      %v1884 = vpop.f32.mrf.mxu0
      %v1885 = vadd.f32 %v1820, %v1884
      %1886 = vmatmul.f32.gmra.mxu0 %v900
      %v1887 = vpop.f32.mrf.mxu0
      %v1888 = vadd.f32 %v1823, %v1887
      %1889 = vmatmul.f32.gmra.mxu0 %v916
      %v1890 = vpop.f32.mrf.mxu0
      %v1891 = vadd.f32 %v1826, %v1890
      %1892 = vdwg.mxu0
      %1893 = vmatpush.msra.mxu0 %v661
      %1894 = vmatpush.msra.mxu0 %v660
      %1895 = vmatpush.msra.mxu0 %v659
      %1896 = vmatpush.msra.mxu0 %v658
      %1897 = vmatpush.msra.mxu0 %v657
      %1898 = vmatpush.msra.mxu0 %v656
      %1899 = vmatpush.msra.mxu0 %v655
      %1900 = vmatpush.msra.mxu0 %v654
      %1901 = vmatpush.msra.mxu0 %v653
      %1902 = vmatpush.msra.mxu0 %v652
      %1903 = vmatpush.msra.mxu0 %v651
      %1904 = vmatpush.msra.mxu0 %v650
      %1905 = vmatpush.msra.mxu0 %v649
      %1906 = vmatpush.msra.mxu0 %v648
      %1907 = vmatpush.msra.mxu0 %v647
      %1908 = vmatpush.msra.mxu0 %v646
      %1909 = vmatmul.f32.gmra.mxu0 %v677
      %v1910 = vpop.f32.mrf.mxu0
      %v1911 = vadd.f32 %v1846, %v1910
      %1912 = vmatmul.f32.gmra.mxu0 %v693
      %v1913 = vpop.f32.mrf.mxu0
      %v1914 = vadd.f32 %v1849, %v1913
      %1915 = vmatmul.f32.gmra.mxu0 %v709
      %v1916 = vpop.f32.mrf.mxu0
      %v1917 = vadd.f32 %v1852, %v1916
      %1918 = vmatmul.f32.gmra.mxu0 %v725
      %v1919 = vpop.f32.mrf.mxu0
      %v1920 = vadd.f32 %v1855, %v1919
      %1921 = vmatmul.f32.gmra.mxu0 %v741
      %v1922 = vpop.f32.mrf.mxu0
      %v1923 = vadd.f32 %v1858, %v1922
      %1924 = vmatmul.f32.gmra.mxu0 %v757
      %v1925 = vpop.f32.mrf.mxu0
      %v1926 = vadd.f32 %v1861, %v1925
      %1927 = vmatmul.f32.gmra.mxu0 %v773
      %v1928 = vpop.f32.mrf.mxu0
      %v1929 = vadd.f32 %v1864, %v1928
      %1930 = vmatmul.f32.gmra.mxu0 %v789
      %v1931 = vpop.f32.mrf.mxu0
      %v1932 = vadd.f32 %v1867, %v1931
      %1933 = vmatmul.f32.gmra.mxu0 %v805
      %v1934 = vpop.f32.mrf.mxu0
      %v1935 = vadd.f32 %v1870, %v1934
      %1936 = vmatmul.f32.gmra.mxu0 %v821
      %v1937 = vpop.f32.mrf.mxu0
      %v1938 = vadd.f32 %v1873, %v1937
      %1939 = vmatmul.f32.gmra.mxu0 %v837
      %v1940 = vpop.f32.mrf.mxu0
      %v1941 = vadd.f32 %v1876, %v1940
      %1942 = vmatmul.f32.gmra.mxu0 %v853
      %v1943 = vpop.f32.mrf.mxu0
      %v1944 = vadd.f32 %v1879, %v1943
      %1945 = vmatmul.f32.gmra.mxu0 %v869
      %v1946 = vpop.f32.mrf.mxu0
      %v1947 = vadd.f32 %v1882, %v1946
      %1948 = vmatmul.f32.gmra.mxu0 %v885
      %v1949 = vpop.f32.mrf.mxu0
      %v1950 = vadd.f32 %v1885, %v1949
      %1951 = vmatmul.f32.gmra.mxu0 %v901
      %v1952 = vpop.f32.mrf.mxu0
      %v1953 = vadd.f32 %v1888, %v1952
      %1954 = vmatmul.f32.gmra.mxu0 %v917
      %v1955 = vpop.f32.mrf.mxu0
      %v1956 = vadd.f32 %v1891, %v1955
      %1957 = vdwg.mxu0
      %vm1958 = vcmask 400384
      %1959 = vst.msk [vmem:[%s148] sm:$0xff] %vm1958, %v1911
      %1960 = vst.msk [vmem:[%s148 + $0x8] sm:$0xff] %vm1958, %v1914
      %1961 = vst.msk [vmem:[%s148 + $0x10] sm:$0xff] %vm1958, %v1917
      %1962 = vst.msk [vmem:[%s148 + $0x18] sm:$0xff] %vm1958, %v1920
      %1963 = vst.msk [vmem:[%s148 + $0x20] sm:$0xff] %vm1958, %v1923
      %1964 = vst.msk [vmem:[%s148 + $0x28] sm:$0xff] %vm1958, %v1926
      %1965 = vst.msk [vmem:[%s148 + $0x30] sm:$0xff] %vm1958, %v1929
      %1966 = vst.msk [vmem:[%s148 + $0x38] sm:$0xff] %vm1958, %v1932
      %1967 = vst.msk [vmem:[%s148 + $0x40] sm:$0xff] %vm1958, %v1935
      %1968 = vst.msk [vmem:[%s148 + $0x48] sm:$0xff] %vm1958, %v1938
      %1969 = vst.msk [vmem:[%s148 + $0x50] sm:$0xff] %vm1958, %v1941
      %1970 = vst.msk [vmem:[%s148 + $0x58] sm:$0xff] %vm1958, %v1944
      %1971 = vst.msk [vmem:[%s148 + $0x60] sm:$0xff] %vm1958, %v1947
      %1972 = vst.msk [vmem:[%s148 + $0x68] sm:$0xff] %vm1958, %v1950
      %1973 = vst.msk [vmem:[%s148 + $0x70] sm:$0xff] %vm1958, %v1953
      %1974 = vst.msk [vmem:[%s148 + $0x78] sm:$0xff] %vm1958, %v1956
      %s1975 = smul.u32 16, %s13
      %p1976 = scmp.lt.s32.totalorder %s1975, 63
      %s1977 = scalar_select %p1976, %s1975, 63
      %s1978 = smul.addr %s1977, 8
      %s1979 = scalar_lea.vmem %s2, %s1978
      // Predicated region
      $region29: #{relu_conv1x1.1} parent=27 // pred_check
        %p1980 = pneg %p78
      $region30: #{relu_conv1x1.1} parent=27 // pred_check_branch
        %1982 = sbr.rel (%p1980) target = $region32
      $region31: #{relu_conv1x1.1} parent=27 // pred_region
        %s1983 = smul.u32 16, %s13
      $region32: #{relu_conv1x1.1} parent=27 // pred_fallthru
        _
    $region28: #{relu_conv1x1.1} parent=5 // pred_fallthru
      _
    %p1984 = scmp.le.s32.totalorder 2, %s8
    // Predicated region
    $region33: #{relu_conv1x1.1} parent=5 // pred_check
      %p1985 = pneg %p1984
    $region34: #{relu_conv1x1.1} parent=5 // pred_check_branch
      %1987 = sbr.rel (%p1985) target = $region36
    $region35: #{relu_conv1x1.1} parent=5 // pred_region
      %s1988 = ssub.s32 %s8, 2
      // Predicated region
      $region37: #{relu_conv1x1.1} parent=35 // pred_check
        %p1989 = pneg %p84
      $region38: #{relu_conv1x1.1} parent=35 // pred_check_branch
        %1991 = sbr.rel (%p1989) target = $region40
      $region39: #{relu_conv1x1.1} parent=35 // pred_region
        %s1992 = smul.u32 16, %s14
        %p1993 = scmp.lt.s32.totalorder %s1992, 63
        %s1994 = scalar_select %p1993, %s1992, 63
        %s1995 = smul.addr %s1994, 8
        %s1996 = scalar_lea.vmem %s2, %s1995
      $region40: #{relu_conv1x1.1} parent=35 // pred_fallthru
        _
    $region36: #{relu_conv1x1.1} parent=5 // pred_fallthru
      _
  $region6: #{relu_conv1x1.1} parent=0 // loop_footer
    %s12 = sadd.s32 1, %s8
  $region7: #{relu_conv1x1.1} parent=0 // loop_footer_branch
    %7 = sbr.rel target = $region3
  $region8: #{relu_conv1x1.1} parent=0 // loop_exit
    _

</llo_original>
